<compile_context>
chip_gen: v7x
topology: tpu7x:2x2x1
jax: 0.10.0
libtpu: 0.0.40
codegen_flags: <defaults>
</compile_context>

<pallas_src>
import functools

import jax
import jax.numpy as jnp
from jax import lax
from jax.experimental import pallas as pl
from jax.experimental.pallas import tpu as pltpu

_LANE = 128
_SUBLANE = 8


def _round_up(v, m):
    return (v + m - 1) // m * m


def _inverted_residual_kernel(*refs, stride, has_expand, use_res, num_strips,
                              strip_rows, out_w, orig_h, orig_w):
    if has_expand:
        (x_ref, w1_ref, b1_ref, wd_ref, b2_ref, w3_ref, b3_ref, o_ref) = refs
    else:
        (x_ref, wd_ref, b2_ref, w3_ref, b3_ref, o_ref) = refs

    S = strip_rows                       # output rows produced by this strip
    Wo = out_w                           # output columns
    _, Hin_s, Wc, Cin_p = x_ref.shape    # packed input strip (with halo)
    Chid_p = wd_ref.shape[-1]
    Cout_p = o_ref.shape[-1]

    x = x_ref[0]                         # (Hin_s, Wc, Cin_p) f32

    # ---- 1x1 expand conv (BN scale folded into w1) + bias + ReLU6 ----------
    if has_expand:
        h = jnp.dot(x.reshape(Hin_s * Wc, Cin_p), w1_ref[...],
                    preferred_element_type=jnp.float32)
        h = jnp.clip(h + b1_ref[...], 0.0, 6.0)
        h = h.reshape(Hin_s, Wc, Chid_p)

        # Zero the positions that correspond to the depthwise conv's zero
        # padding (the expand bias makes them nonzero otherwise).
        strip = pl.program_id(0) % num_strips
        row0 = strip * (S * stride)
        l = lax.broadcasted_iota(jnp.int32, (Hin_s, Wc, 1), 0)
        c = lax.broadcasted_iota(jnp.int32, (Hin_s, Wc, 1), 1)
        if stride == 1:
            roff, coff = l, c
        else:  # packed layout: [even rows/cols ... , odd rows/cols ...]
            roff = jnp.where(l <= S, 2 * l, 2 * (l - (S + 1)) + 1)
            coff = jnp.where(c <= Wo, 2 * c, 2 * (c - (Wo + 1)) + 1)
        grow = row0 + roff
        valid = ((grow >= 1) & (grow <= orig_h) &
                 (coff >= 1) & (coff <= orig_w))
        h = jnp.where(valid, h, 0.0)
    else:
        h = x                            # already zero at padded positions

    # ---- 3x3 depthwise conv + bias + ReLU6 (VPU) ----------------------------
    def tap(kh, kw):
        if stride == 1:
            return h[kh:kh + S, kw:kw + Wo, :]
        rb = 0 if kh % 2 == 0 else S + 1        # even/odd row plane
        cb = 0 if kw % 2 == 0 else Wo + 1       # even/odd col plane
        r0 = rb + kh // 2
        c0 = cb + kw // 2
        return h[r0:r0 + S, c0:c0 + Wo, :]

    acc = jnp.zeros((S, Wo, Chid_p), jnp.float32)
    for kh in range(3):
        for kw in range(3):
            acc = acc + tap(kh, kw) * wd_ref[kh, kw, :]
    acc = jnp.clip(acc + b2_ref[...], 0.0, 6.0)

    # ---- 1x1 project conv + bias (MXU) --------------------------------------
    y = jnp.dot(acc.reshape(S * Wo, Chid_p), w3_ref[...],
                preferred_element_type=jnp.float32)
    y = (y + b3_ref[...]).reshape(S, Wo, Cout_p)

    if use_res:  # stride == 1, Cin == Cout (padded dims match)
        y = y + x[1:1 + S, 1:1 + Wo, :]

    o_ref[0] = y.astype(o_ref.dtype)


def init_params(key, in_channels, out_channels, expand_ratio, eps=1e-5):
    """Deterministic synthetic parameters; BN folded to (scale, bias)."""
    hidden = in_channels * expand_ratio
    ks = jax.random.split(key, 15)

    def folded_bn(kg, kb, km, kv, c):
        gamma = jax.random.uniform(kg, (c,), jnp.float32, 0.5, 1.5)
        beta = 0.1 * jax.random.normal(kb, (c,), jnp.float32)
        mean = 0.1 * jax.random.normal(km, (c,), jnp.float32)
        var = jax.random.uniform(kv, (c,), jnp.float32, 0.5, 1.5)
        scale = gamma / jnp.sqrt(var + eps)
        bias = beta - mean * scale
        return scale.reshape(1, c), bias.reshape(1, c)

    w1 = 0.2 * jax.random.normal(ks[0], (in_channels, hidden), jnp.float32)
    s1, b1 = folded_bn(ks[1], ks[2], ks[3], ks[4], hidden)
    wd = 0.2 * jax.random.normal(ks[5], (3, 3, hidden), jnp.float32)
    s2, b2 = folded_bn(ks[6], ks[7], ks[8], ks[9], hidden)
    w3 = 0.2 * jax.random.normal(ks[10], (hidden, out_channels), jnp.float32)
    s3, b3 = folded_bn(ks[11], ks[12], ks[13], ks[14], out_channels)
    return dict(w1=w1, s1=s1, b1=b1, wd=wd, s2=s2, b2=b2, w3=w3, s3=s3, b3=b3)


def inverted_residual(x_nchw, p, *, in_channels, out_channels, stride,
                      expand_ratio, strip_rows=8):
    assert stride in (1, 2)
    N, Cin, H, W = x_nchw.shape
    assert Cin == in_channels
    hidden = in_channels * expand_ratio
    Ho = (H - 1) // stride + 1
    Wo = (W - 1) // stride + 1
    has_expand = expand_ratio != 1
    use_res = (stride == 1) and (in_channels == out_channels)

    # Lane-dense channel padding.
    Cin_p = _round_up(Cin, _LANE)
    Chid_p = _round_up(hidden, _LANE)
    Cout_p = _round_up(out_channels, _LANE)

    # ---- strip geometry ------------------------------------------------------
    S = min(strip_rows, Ho)              # output rows per strip
    ns = -(-Ho // S)                     # number of row strips
    Ho_p = ns * S

    if stride == 1:
        Hin_s = S + 2
        col_off = jnp.arange(W + 2)                              # identity
        wc_used = W + 2
        row_local = jnp.arange(Hin_s)
        max_row, max_col = Ho_p + 1, W + 1
    else:
        Hin_s = 2 * S + 1
        col_off = jnp.concatenate([2 * jnp.arange(Wo + 1),      # even cols
                                   2 * jnp.arange(Wo) + 1])     # odd cols
        wc_used = 2 * Wo + 1
        row_local = jnp.concatenate([2 * jnp.arange(S + 1),     # even rows
                                     2 * jnp.arange(S) + 1])    # odd rows
        max_row, max_col = 2 * Ho_p, 2 * Wo

    Wc = _round_up(wc_used, _SUBLANE)
    bpad = max(0, max_row + 1 - (H + 1))
    rpad = max(0, max_col + 1 - (W + 1))

    # ---- build packed, zero-padded, overlapping input strips (NHWC) --------
    x_nhwc = jnp.transpose(x_nchw, (0, 2, 3, 1)).astype(jnp.float32)
    x_p = jnp.pad(x_nhwc, ((0, 0), (1, bpad), (1, rpad), (0, Cin_p - Cin)))
    x_p = x_p[:, :, col_off, :]                          # column pack
    if Wc > wc_used:
        x_p = jnp.pad(x_p, ((0, 0), (0, 0), (0, Wc - wc_used), (0, 0)))
    starts = jnp.arange(ns) * (S * stride)
    row_idx = starts[:, None] + row_local[None, :]       # (ns, Hin_s)
    x_strips = x_p[:, row_idx].reshape(N * ns, Hin_s, Wc, Cin_p)

    # ---- fold BN scales into weights, zero-pad to lane-dense shapes ---------
    def pad2(a, r, c):
        return jnp.zeros((r, c), jnp.float32).at[:a.shape[0], :a.shape[1]].set(a)

    wd_f = p['wd'] * p['s2'].reshape(1, 1, -1)
    wd_p = jnp.zeros((3, 3, Chid_p), jnp.float32).at[:, :, :hidden].set(wd_f)
    b2_p = pad2(p['b2'], 1, Chid_p)
    w3_p = pad2(p['w3'] * p['s3'].reshape(1, -1), Chid_p, Cout_p)
    b3_p = pad2(p['b3'], 1, Cout_p)

    def const_spec(shape):
        return pl.BlockSpec(shape, lambda i, _nd=len(shape): (0,) * _nd)

    inputs = [x_strips]
    in_specs = [pl.BlockSpec((1, Hin_s, Wc, Cin_p), lambda i: (i, 0, 0, 0))]
    if has_expand:
        w1_p = pad2(p['w1'] * p['s1'].reshape(1, -1), Cin_p, Chid_p)
        b1_p = pad2(p['b1'], 1, Chid_p)
        inputs += [w1_p, b1_p]
        in_specs += [const_spec((Cin_p, Chid_p)), const_spec((1, Chid_p))]
    inputs += [wd_p, b2_p, w3_p, b3_p]
    in_specs += [const_spec((3, 3, Chid_p)), const_spec((1, Chid_p)),
                 const_spec((Chid_p, Cout_p)), const_spec((1, Cout_p))]

    G = N * ns
    flops = 2 * 9 * G * S * Wo * Chid_p + 2 * G * S * Wo * Chid_p * Cout_p
    if has_expand:
        flops += 2 * G * Hin_s * Wc * Cin_p * Chid_p
    bytes_accessed = 4 * (x_strips.size + G * S * Wo * Cout_p
                          + sum(int(a.size) for a in inputs[1:]))

    kernel = functools.partial(
        _inverted_residual_kernel, stride=stride, has_expand=has_expand,
        use_res=use_res, num_strips=ns, strip_rows=S, out_w=Wo,
        orig_h=H, orig_w=W)

    out = pl.pallas_call(
        kernel,
        out_shape=jax.ShapeDtypeStruct((G, S, Wo, Cout_p), jnp.float32),
        grid=(G,),
        in_specs=in_specs,
        out_specs=pl.BlockSpec((1, S, Wo, Cout_p), lambda i: (i, 0, 0, 0)),
        compiler_params=pltpu.CompilerParams(
            dimension_semantics=("parallel",)),
        cost_estimate=pl.CostEstimate(flops=int(flops), transcendentals=0,
                                      bytes_accessed=int(bytes_accessed)),
    )(*inputs)

    out = out.reshape(N, Ho_p, Wo, Cout_p)[:, :Ho, :, :out_channels]
    return jnp.transpose(out, (0, 3, 1, 2))               # back to NCHW


def reference(x_nchw, p, *, in_channels, out_channels, stride, expand_ratio):
    """Pure-JAX reference with identical math (NHWC internally)."""
    x = jnp.transpose(x_nchw, (0, 2, 3, 1)).astype(jnp.float32)
    N, H, W, _ = x.shape
    if expand_ratio != 1:
        h = jnp.einsum('nhwc,cd->nhwd', x, p['w1'])
        h = jnp.clip(h * p['s1'][0] + p['b1'][0], 0.0, 6.0)
    else:
        h = x
    hp = jnp.pad(h, ((0, 0), (1, 1), (1, 1), (0, 0)))
    Ho = (H - 1) // stride + 1
    Wo = (W - 1) // stride + 1
    acc = jnp.zeros((N, Ho, Wo, h.shape[-1]), jnp.float32)
    for kh in range(3):
        for kw in range(3):
            acc = acc + hp[:, kh:kh + stride * (Ho - 1) + 1:stride,
                           kw:kw + stride * (Wo - 1) + 1:stride, :] * p['wd'][kh, kw]
    acc = jnp.clip(acc * p['s2'][0] + p['b2'][0], 0.0, 6.0)
    y = jnp.einsum('nhwc,cd->nhwd', acc, p['w3']) * p['s3'][0] + p['b3'][0]
    if stride == 1 and in_channels == out_channels:
        y = y + x
    return jnp.transpose(y, (0, 3, 1, 2))


if __name__ == "__main__":
    key = jax.random.PRNGKey(0)
    N, H, W = 2, 16, 16
    configs = [
        dict(in_channels=4, out_channels=4, stride=1, expand_ratio=6),  # residual
        dict(in_channels=4, out_channels=8, stride=2, expand_ratio=6),  # stride 2
        dict(in_channels=4, out_channels=4, stride=1, expand_ratio=1),  # no expand
    ]
    for cfg in configs:
        kx, kp, key = jax.random.split(key, 3)
        x = jax.random.normal(kx, (N, cfg['in_channels'], H, W), jnp.float32)
        params = init_params(kp, cfg['in_channels'], cfg['out_channels'],
                             cfg['expand_ratio'])
        out = inverted_residual(x, params, **cfg)
        out = jax.block_until_ready(out)
        ref = reference(x, params, **cfg)
        Ho = (H - 1) // cfg['stride'] + 1
        Wo = (W - 1) // cfg['stride'] + 1
        assert out.shape == (N, cfg['out_channels'], Ho, Wo), out.shape
        err = float(jnp.max(jnp.abs(out - ref)))
        assert err < 1e-4, (cfg, err)
    print("KERNEL_OK")
</pallas_src>

<mosaic_0001>
module attributes {stable_mosaic.version = 11 : i64} {
  func.func @_inverted_residual_kernel(%arg0: i32, %arg1: memref<1x10x24x128xf32, #tpu.memory_space<vmem>>, %arg2: memref<128x128xf32, #tpu.memory_space<vmem>>, %arg3: memref<1x128xf32, #tpu.memory_space<vmem>>, %arg4: memref<3x3x128xf32, #tpu.memory_space<vmem>>, %arg5: memref<1x128xf32, #tpu.memory_space<vmem>>, %arg6: memref<128x128xf32, #tpu.memory_space<vmem>>, %arg7: memref<1x128xf32, #tpu.memory_space<vmem>>, %arg8: memref<1x8x16x128xf32, #tpu.memory_space<vmem>>) attributes {dimension_semantics = [#tpu.dimension_semantics<parallel>], iteration_bounds = array<i64: 4>, scalar_prefetch = 0 : i64, scratch_operands = 0 : i64, tpu.core_type = #tpu.core_type<tc>, window_params = [{transform_indices = @transform_0, window_bounds = array<i64: 1, 10, 24, 128>}, {pipeline_mode = #tpu.pipeline_mode<synchronous>, transform_indices = @transform_1, window_bounds = array<i64: 128, 128>}, {pipeline_mode = #tpu.pipeline_mode<synchronous>, transform_indices = @transform_2, window_bounds = array<i64: 1, 128>}, {pipeline_mode = #tpu.pipeline_mode<synchronous>, transform_indices = @transform_3, window_bounds = array<i64: 3, 3, 128>}, {pipeline_mode = #tpu.pipeline_mode<synchronous>, transform_indices = @transform_4, window_bounds = array<i64: 1, 128>}, {pipeline_mode = #tpu.pipeline_mode<synchronous>, transform_indices = @transform_5, window_bounds = array<i64: 128, 128>}, {pipeline_mode = #tpu.pipeline_mode<synchronous>, transform_indices = @transform_6, window_bounds = array<i64: 1, 128>}, {transform_indices = @transform_7, window_bounds = array<i64: 1, 8, 16, 128>}]} {
    %c0 = arith.constant 0 : index
    %c0_0 = arith.constant 0 : index
    %c0_1 = arith.constant 0 : index
    %c0_2 = arith.constant 0 : index
    %0 = vector.load %arg1[%c0, %c0_0, %c0_1, %c0_2] : memref<1x10x24x128xf32, #tpu.memory_space<vmem>>, vector<1x10x24x128xf32>
    %1 = vector.shape_cast %0 : vector<1x10x24x128xf32> to vector<10x24x128xf32>
    %2 = vector.shape_cast %1 : vector<10x24x128xf32> to vector<240x128xf32>
    %c0_3 = arith.constant 0 : index
    %c0_4 = arith.constant 0 : index
    %3 = vector.load %arg2[%c0_3, %c0_4] : memref<128x128xf32, #tpu.memory_space<vmem>>, vector<128x128xf32>
    %cst = arith.constant dense<0.000000e+00> : vector<240x128xf32>
    %4 = tpu.matmul %2, %3, %cst {dimension_numbers = #tpu.dot_dimension_numbers<[1], [0], [0], [1], [0, 0, 1, 1], [], []>} : vector<240x128xf32>, vector<128x128xf32>, vector<240x128xf32> -> vector<240x128xf32>
    %c0_5 = arith.constant 0 : index
    %c0_6 = arith.constant 0 : index
    %5 = vector.load %arg3[%c0_5, %c0_6] : memref<1x128xf32, #tpu.memory_space<vmem>>, vector<1x128xf32>
    %6 = vector.broadcast %5 : vector<1x128xf32> to vector<240x128xf32>
    %7 = arith.addf %4, %6 : vector<240x128xf32>
    %cst_7 = arith.constant 0.000000e+00 : f32
    %cst_8 = arith.constant 6.000000e+00 : f32
    %8 = vector.broadcast %cst_7 : f32 to vector<240x128xf32>
    %9 = arith.maximumf %8, %7 : vector<240x128xf32>
    %10 = vector.broadcast %cst_8 : f32 to vector<240x128xf32>
    %11 = arith.minimumf %10, %9 : vector<240x128xf32>
    %12 = vector.shape_cast %11 : vector<240x128xf32> to vector<10x24x128xf32>
    %c2_i32 = arith.constant 2 : i32
    %c0_i32 = arith.constant 0 : i32
    %13 = arith.cmpi eq, %c2_i32, %c0_i32 : i32
    %c1_i32 = arith.constant 1 : i32
    %14 = arith.select %13, %c1_i32, %c2_i32 : i32
    %15 = arith.remsi %arg0, %14 : i32
    %c0_i32_9 = arith.constant 0 : i32
    %16 = arith.cmpi ne, %15, %c0_i32_9 : i32
    %c0_i32_10 = arith.constant 0 : i32
    %17 = arith.cmpi slt, %15, %c0_i32_10 : i32
    %c0_i32_11 = arith.constant 0 : i32
    %18 = arith.cmpi slt, %14, %c0_i32_11 : i32
    %19 = arith.xori %17, %18 : i1
    %20 = arith.andi %19, %16 : i1
    %21 = arith.addi %15, %14 : i32
    %22 = arith.select %20, %21, %15 : i32
    %c8_i32 = arith.constant 8 : i32
    %23 = arith.muli %22, %c8_i32 : i32
    %24 = tpu.iota {dimensions = array<i32: 0>} : vector<10x24x1xi32>
    %25 = tpu.iota {dimensions = array<i32: 1>} : vector<10x24x1xi32>
    %26 = vector.broadcast %23 : i32 to vector<10x24x1xi32>
    %27 = arith.addi %26, %24 : vector<10x24x1xi32>
    %c1_i32_12 = arith.constant 1 : i32
    %28 = vector.broadcast %c1_i32_12 : i32 to vector<10x24x1xi32>
    %29 = arith.cmpi sge, %27, %28 : vector<10x24x1xi32>
    %c16_i32 = arith.constant 16 : i32
    %30 = vector.broadcast %c16_i32 : i32 to vector<10x24x1xi32>
    %31 = arith.cmpi sle, %27, %30 : vector<10x24x1xi32>
    %32 = arith.andi %29, %31 : vector<10x24x1xi1>
    %c1_i32_13 = arith.constant 1 : i32
    %33 = vector.broadcast %c1_i32_13 : i32 to vector<10x24x1xi32>
    %34 = arith.cmpi sge, %25, %33 : vector<10x24x1xi32>
    %35 = arith.andi %32, %34 : vector<10x24x1xi1>
    %c16_i32_14 = arith.constant 16 : i32
    %36 = vector.broadcast %c16_i32_14 : i32 to vector<10x24x1xi32>
    %37 = arith.cmpi sle, %25, %36 : vector<10x24x1xi32>
    %38 = arith.andi %35, %37 : vector<10x24x1xi1>
    %cst_15 = arith.constant 0.000000e+00 : f32
    %39 = vector.shape_cast %38 : vector<10x24x1xi1> to vector<10x24x1xi1>
    %40 = vector.broadcast %39 : vector<10x24x1xi1> to vector<10x24x128xi1>
    %41 = vector.broadcast %cst_15 : f32 to vector<10x24x128xf32>
    %42 = arith.select %40, %12, %41 : vector<10x24x128xi1>, vector<10x24x128xf32>
    %cst_16 = arith.constant 0.000000e+00 : f32
    %43 = vector.broadcast %cst_16 : f32 to vector<8x16x128xf32>
    %44 = vector.extract_strided_slice %42 {offsets = [0, 0, 0], sizes = [8, 16, 128], strides = [1, 1, 1]} : vector<10x24x128xf32> to vector<8x16x128xf32>
    %c0_17 = arith.constant 0 : index
    %c0_18 = arith.constant 0 : index
    %c0_19 = arith.constant 0 : index
    %45 = vector.load %arg4[%c0_17, %c0_18, %c0_19] : memref<3x3x128xf32, #tpu.memory_space<vmem>>, vector<1x1x128xf32>
    %46 = vector.shape_cast %45 : vector<1x1x128xf32> to vector<128xf32>
    %47 = vector.shape_cast %46 : vector<128xf32> to vector<1x1x128xf32>
    %48 = vector.broadcast %47 : vector<1x1x128xf32> to vector<8x16x128xf32>
    %49 = arith.mulf %44, %48 : vector<8x16x128xf32>
    %50 = arith.addf %43, %49 : vector<8x16x128xf32>
    %51 = vector.extract_strided_slice %42 {offsets = [0, 1, 0], sizes = [8, 16, 128], strides = [1, 1, 1]} : vector<10x24x128xf32> to vector<8x16x128xf32>
    %c0_20 = arith.constant 0 : index
    %c1 = arith.constant 1 : index
    %c0_21 = arith.constant 0 : index
    %52 = vector.load %arg4[%c0_20, %c1, %c0_21] : memref<3x3x128xf32, #tpu.memory_space<vmem>>, vector<1x1x128xf32>
    %53 = vector.shape_cast %52 : vector<1x1x128xf32> to vector<128xf32>
    %54 = vector.shape_cast %53 : vector<128xf32> to vector<1x1x128xf32>
    %55 = vector.broadcast %54 : vector<1x1x128xf32> to vector<8x16x128xf32>
    %56 = arith.mulf %51, %55 : vector<8x16x128xf32>
    %57 = arith.addf %50, %56 : vector<8x16x128xf32>
    %58 = vector.extract_strided_slice %42 {offsets = [0, 2, 0], sizes = [8, 16, 128], strides = [1, 1, 1]} : vector<10x24x128xf32> to vector<8x16x128xf32>
    %c0_22 = arith.constant 0 : index
    %c2 = arith.constant 2 : index
    %c0_23 = arith.constant 0 : index
    %59 = vector.load %arg4[%c0_22, %c2, %c0_23] : memref<3x3x128xf32, #tpu.memory_space<vmem>>, vector<1x1x128xf32>
    %60 = vector.shape_cast %59 : vector<1x1x128xf32> to vector<128xf32>
    %61 = vector.shape_cast %60 : vector<128xf32> to vector<1x1x128xf32>
    %62 = vector.broadcast %61 : vector<1x1x128xf32> to vector<8x16x128xf32>
    %63 = arith.mulf %58, %62 : vector<8x16x128xf32>
    %64 = arith.addf %57, %63 : vector<8x16x128xf32>
    %65 = vector.extract_strided_slice %42 {offsets = [1, 0, 0], sizes = [8, 16, 128], strides = [1, 1, 1]} : vector<10x24x128xf32> to vector<8x16x128xf32>
    %c1_24 = arith.constant 1 : index
    %c0_25 = arith.constant 0 : index
    %c0_26 = arith.constant 0 : index
    %66 = vector.load %arg4[%c1_24, %c0_25, %c0_26] : memref<3x3x128xf32, #tpu.memory_space<vmem>>, vector<1x1x128xf32>
    %67 = vector.shape_cast %66 : vector<1x1x128xf32> to vector<128xf32>
    %68 = vector.shape_cast %67 : vector<128xf32> to vector<1x1x128xf32>
    %69 = vector.broadcast %68 : vector<1x1x128xf32> to vector<8x16x128xf32>
    %70 = arith.mulf %65, %69 : vector<8x16x128xf32>
    %71 = arith.addf %64, %70 : vector<8x16x128xf32>
    %72 = vector.extract_strided_slice %42 {offsets = [1, 1, 0], sizes = [8, 16, 128], strides = [1, 1, 1]} : vector<10x24x128xf32> to vector<8x16x128xf32>
    %c1_27 = arith.constant 1 : index
    %c1_28 = arith.constant 1 : index
    %c0_29 = arith.constant 0 : index
    %73 = vector.load %arg4[%c1_27, %c1_28, %c0_29] : memref<3x3x128xf32, #tpu.memory_space<vmem>>, vector<1x1x128xf32>
    %74 = vector.shape_cast %73 : vector<1x1x128xf32> to vector<128xf32>
    %75 = vector.shape_cast %74 : vector<128xf32> to vector<1x1x128xf32>
    %76 = vector.broadcast %75 : vector<1x1x128xf32> to vector<8x16x128xf32>
    %77 = arith.mulf %72, %76 : vector<8x16x128xf32>
    %78 = arith.addf %71, %77 : vector<8x16x128xf32>
    %79 = vector.extract_strided_slice %42 {offsets = [1, 2, 0], sizes = [8, 16, 128], strides = [1, 1, 1]} : vector<10x24x128xf32> to vector<8x16x128xf32>
    %c1_30 = arith.constant 1 : index
    %c2_31 = arith.constant 2 : index
    %c0_32 = arith.constant 0 : index
    %80 = vector.load %arg4[%c1_30, %c2_31, %c0_32] : memref<3x3x128xf32, #tpu.memory_space<vmem>>, vector<1x1x128xf32>
    %81 = vector.shape_cast %80 : vector<1x1x128xf32> to vector<128xf32>
    %82 = vector.shape_cast %81 : vector<128xf32> to vector<1x1x128xf32>
    %83 = vector.broadcast %82 : vector<1x1x128xf32> to vector<8x16x128xf32>
    %84 = arith.mulf %79, %83 : vector<8x16x128xf32>
    %85 = arith.addf %78, %84 : vector<8x16x128xf32>
    %86 = vector.extract_strided_slice %42 {offsets = [2, 0, 0], sizes = [8, 16, 128], strides = [1, 1, 1]} : vector<10x24x128xf32> to vector<8x16x128xf32>
    %c2_33 = arith.constant 2 : index
    %c0_34 = arith.constant 0 : index
    %c0_35 = arith.constant 0 : index
    %87 = vector.load %arg4[%c2_33, %c0_34, %c0_35] : memref<3x3x128xf32, #tpu.memory_space<vmem>>, vector<1x1x128xf32>
    %88 = vector.shape_cast %87 : vector<1x1x128xf32> to vector<128xf32>
    %89 = vector.shape_cast %88 : vector<128xf32> to vector<1x1x128xf32>
    %90 = vector.broadcast %89 : vector<1x1x128xf32> to vector<8x16x128xf32>
    %91 = arith.mulf %86, %90 : vector<8x16x128xf32>
    %92 = arith.addf %85, %91 : vector<8x16x128xf32>
    %93 = vector.extract_strided_slice %42 {offsets = [2, 1, 0], sizes = [8, 16, 128], strides = [1, 1, 1]} : vector<10x24x128xf32> to vector<8x16x128xf32>
    %c2_36 = arith.constant 2 : index
    %c1_37 = arith.constant 1 : index
    %c0_38 = arith.constant 0 : index
    %94 = vector.load %arg4[%c2_36, %c1_37, %c0_38] : memref<3x3x128xf32, #tpu.memory_space<vmem>>, vector<1x1x128xf32>
    %95 = vector.shape_cast %94 : vector<1x1x128xf32> to vector<128xf32>
    %96 = vector.shape_cast %95 : vector<128xf32> to vector<1x1x128xf32>
    %97 = vector.broadcast %96 : vector<1x1x128xf32> to vector<8x16x128xf32>
    %98 = arith.mulf %93, %97 : vector<8x16x128xf32>
    %99 = arith.addf %92, %98 : vector<8x16x128xf32>
    %100 = vector.extract_strided_slice %42 {offsets = [2, 2, 0], sizes = [8, 16, 128], strides = [1, 1, 1]} : vector<10x24x128xf32> to vector<8x16x128xf32>
    %c2_39 = arith.constant 2 : index
    %c2_40 = arith.constant 2 : index
    %c0_41 = arith.constant 0 : index
    %101 = vector.load %arg4[%c2_39, %c2_40, %c0_41] : memref<3x3x128xf32, #tpu.memory_space<vmem>>, vector<1x1x128xf32>
    %102 = vector.shape_cast %101 : vector<1x1x128xf32> to vector<128xf32>
    %103 = vector.shape_cast %102 : vector<128xf32> to vector<1x1x128xf32>
    %104 = vector.broadcast %103 : vector<1x1x128xf32> to vector<8x16x128xf32>
    %105 = arith.mulf %100, %104 : vector<8x16x128xf32>
    %106 = arith.addf %99, %105 : vector<8x16x128xf32>
    %c0_42 = arith.constant 0 : index
    %c0_43 = arith.constant 0 : index
    %107 = vector.load %arg5[%c0_42, %c0_43] : memref<1x128xf32, #tpu.memory_space<vmem>>, vector<1x128xf32>
    %108 = vector.shape_cast %107 : vector<1x128xf32> to vector<1x1x128xf32>
    %109 = vector.broadcast %108 : vector<1x1x128xf32> to vector<8x16x128xf32>
    %110 = arith.addf %106, %109 : vector<8x16x128xf32>
    %cst_44 = arith.constant 0.000000e+00 : f32
    %cst_45 = arith.constant 6.000000e+00 : f32
    %111 = vector.broadcast %cst_44 : f32 to vector<8x16x128xf32>
    %112 = arith.maximumf %111, %110 : vector<8x16x128xf32>
    %113 = vector.broadcast %cst_45 : f32 to vector<8x16x128xf32>
    %114 = arith.minimumf %113, %112 : vector<8x16x128xf32>
    %115 = vector.shape_cast %114 : vector<8x16x128xf32> to vector<128x128xf32>
    %c0_46 = arith.constant 0 : index
    %c0_47 = arith.constant 0 : index
    %116 = vector.load %arg6[%c0_46, %c0_47] : memref<128x128xf32, #tpu.memory_space<vmem>>, vector<128x128xf32>
    %cst_48 = arith.constant dense<0.000000e+00> : vector<128x128xf32>
    %117 = tpu.matmul %115, %116, %cst_48 {dimension_numbers = #tpu.dot_dimension_numbers<[1], [0], [0], [1], [0, 0, 1, 1], [], []>} : vector<128x128xf32>, vector<128x128xf32>, vector<128x128xf32> -> vector<128x128xf32>
    %c0_49 = arith.constant 0 : index
    %c0_50 = arith.constant 0 : index
    %118 = vector.load %arg7[%c0_49, %c0_50] : memref<1x128xf32, #tpu.memory_space<vmem>>, vector<1x128xf32>
    %119 = vector.broadcast %118 : vector<1x128xf32> to vector<128x128xf32>
    %120 = arith.addf %117, %119 : vector<128x128xf32>
    %121 = vector.shape_cast %120 : vector<128x128xf32> to vector<8x16x128xf32>
    %122 = vector.extract_strided_slice %1 {offsets = [1, 1, 0], sizes = [8, 16, 128], strides = [1, 1, 1]} : vector<10x24x128xf32> to vector<8x16x128xf32>
    %123 = arith.addf %121, %122 : vector<8x16x128xf32>
    %c0_51 = arith.constant 0 : index
    %c0_52 = arith.constant 0 : index
    %c0_53 = arith.constant 0 : index
    %c0_54 = arith.constant 0 : index
    %124 = vector.load %arg8[%c0_51, %c0_52, %c0_53, %c0_54] : memref<1x8x16x128xf32, #tpu.memory_space<vmem>>, vector<1x8x16x128xf32>
    %125 = vector.shape_cast %124 : vector<1x8x16x128xf32> to vector<8x16x128xf32>
    %126 = vector.shape_cast %123 : vector<8x16x128xf32> to vector<1x8x16x128xf32>
    tpu.vector_store %arg8[%c0_51, %c0_52, %c0_53, %c0_54], %126 {strides = array<i32>} : memref<1x8x16x128xf32, #tpu.memory_space<vmem>>, vector<1x8x16x128xf32>,
    return
  }
  func.func @transform_0(%arg0: i32) -> (i32, i32, i32, i32) {
    %c0_i32 = arith.constant 0 : i32
    %c0_i32_0 = arith.constant 0 : i32
    %c0_i32_1 = arith.constant 0 : i32
    %c0_i32_2 = arith.constant 0 : i32
    return %arg0, %c0_i32, %c0_i32_0, %c0_i32_1 : i32, i32, i32, i32
  }
  func.func @transform_1(%arg0: i32) -> (i32, i32) {
    %c0_i32 = arith.constant 0 : i32
    %c0_i32_0 = arith.constant 0 : i32
    %c0_i32_1 = arith.constant 0 : i32
    return %c0_i32, %c0_i32_0 : i32, i32
  }
  func.func @transform_2(%arg0: i32) -> (i32, i32) {
    %c0_i32 = arith.constant 0 : i32
    %c0_i32_0 = arith.constant 0 : i32
    %c0_i32_1 = arith.constant 0 : i32
    return %c0_i32, %c0_i32_0 : i32, i32
  }
  func.func @transform_3(%arg0: i32) -> (i32, i32, i32) {
    %c0_i32 = arith.constant 0 : i32
    %c0_i32_0 = arith.constant 0 : i32
    %c0_i32_1 = arith.constant 0 : i32
    %c0_i32_2 = arith.constant 0 : i32
    return %c0_i32, %c0_i32_0, %c0_i32_1 : i32, i32, i32
  }
  func.func @transform_4(%arg0: i32) -> (i32, i32) {
    %c0_i32 = arith.constant 0 : i32
    %c0_i32_0 = arith.constant 0 : i32
    %c0_i32_1 = arith.constant 0 : i32
    return %c0_i32, %c0_i32_0 : i32, i32
  }
  func.func @transform_5(%arg0: i32) -> (i32, i32) {
    %c0_i32 = arith.constant 0 : i32
    %c0_i32_0 = arith.constant 0 : i32
    %c0_i32_1 = arith.constant 0 : i32
    return %c0_i32, %c0_i32_0 : i32, i32
  }
  func.func @transform_6(%arg0: i32) -> (i32, i32) {
    %c0_i32 = arith.constant 0 : i32
    %c0_i32_0 = arith.constant 0 : i32
    %c0_i32_1 = arith.constant 0 : i32
    return %c0_i32, %c0_i32_0 : i32, i32
  }
  func.func @transform_7(%arg0: i32) -> (i32, i32, i32, i32) {
    %c0_i32 = arith.constant 0 : i32
    %c0_i32_0 = arith.constant 0 : i32
    %c0_i32_1 = arith.constant 0 : i32
    %c0_i32_2 = arith.constant 0 : i32
    return %arg0, %c0_i32, %c0_i32_0, %c0_i32_1 : i32, i32, i32, i32
  }
}

</mosaic_0001>

<llo_original>
// kernel: tpu_custom_call.1
$region0: #{tpu_custom_call.1}
  #allocation0 [shape = 'u32[]', space=smem, size = 0x4, offset = 0x4, fixed_abs, tag = 'smem constant byte address 0x4 - core index']
  #allocation1 [shape = 'u32[144,128]{1,0:T(1,128)}', space=vmem, size = 0x12000, scoped, tag = 'internal scratch']
  %s0 = inlined_call_operand.hbm [shape: f32[4,10,24,128], index: 0, kind: input, shape index: {}]
  %s1 = inlined_call_operand.hbm [shape: f32[128,128], index: 1, kind: input, shape index: {}]
  %s2 = inlined_call_operand.vmem [shape: f32[1,128], index: 2, kind: input, shape index: {}]
  %s3 = inlined_call_operand.hbm [shape: f32[3,3,128], index: 3, kind: input, shape index: {}]
  %s4 = inlined_call_operand.vmem [shape: f32[1,128], index: 4, kind: input, shape index: {}]
  %s5 = inlined_call_operand.hbm [shape: f32[128,128], index: 5, kind: input, shape index: {}]
  %s6 = inlined_call_operand.vmem [shape: f32[1,128], index: 6, kind: input, shape index: {}]
  %s7 = inlined_call_operand.hbm [shape: f32[4,8,16,128], index: 7, kind: output, shape index: {}]
  %s8 = sld [smem:[#allocation0]]
  $region77: #{tpu_custom_call.1} parent=0
    _
  %s10 = ssub.s32 1, %s8
  %s11 = scalar_select 0, %s10, %s8
  $region1: #{tpu_custom_call.1} parent=0
    #allocation2 [shape = 'u8[245760]{0}', space=vmem, size = 0x3c000, scoped, tag = 'input window, operand 0']
    #allocation3 [shape = 's32[2]{0}', space=sflag, size = 0x8, scoped, tag = 'scoped memory for tpu_custom_call.1']
    #allocation4 [shape = 's32[2]{0}', space=sflag, size = 0x8, scoped, tag = 'scoped memory for tpu_custom_call.1']
    #allocation5 [shape = 'u8[65536]{0}', space=vmem, size = 0x10000, scoped, tag = 'input window, operand 1, single buffered']
    #allocation6 [shape = 's32[1]{0}', space=sflag, size = 0x4, scoped, tag = 'scoped memory for tpu_custom_call.1']
    #allocation7 [shape = 'u8[6144]{0}', space=vmem, size = 0x1800, scoped, tag = 'input window, operand 3, single buffered']
    #allocation8 [shape = 'u8[65536]{0}', space=vmem, size = 0x10000, scoped, tag = 'input window, operand 5, single buffered']
    #allocation9 [shape = 's32[1]{0}', space=sflag, size = 0x4, scoped, tag = 'scoped memory for tpu_custom_call.1']
    #allocation10 [shape = 'u8[131072]{0}', space=vmem, size = 0x20000, scoped, tag = 'output window, operand 0']
    %12 = vsyncpa [#allocation3], 0
    %s13 = scalar_lea.sflag [#allocation3], 1
    %14 = vsyncpa %s13, 0
    %15 = vsyncpa [#allocation6], 0
    %16 = vsyncpa [#allocation9], 0
    %17 = vsyncpa [#allocation4], 0
    %s18 = scalar_lea.sflag [#allocation4], 1
    %19 = vsyncpa %s18, 0
    loop: start=0, step=1, limit=6
    $region2: #{tpu_custom_call.1} parent=1 // loop_pre_header
      _
    $region3: #{tpu_custom_call.1} parent=1 // loop_header
      %s21 = sphi 0, %s25
      %p22 = scmp.ge.s32.totalorder %s21, 6
      %s31 = sphi 0, %s33
      %s34 = sphi 0, %s31
      %s35 = sphi 0, %s34
      %s51 = sphi 0, %s35
      %s55 = sphi 0, %s55
      %s57 = sphi 0, %s55
      %s58 = sphi 0, %s57
      %s72 = sphi 0, %s58
      %s76 = sphi 0, %s76
      %s78 = sphi 0, %s76
      %s79 = sphi 0, %s78
      %s93 = sphi 0, %s79
      %s97 = sphi 0, %s97
      %s99 = sphi 0, %s97
      %s100 = sphi 0, %s99
      %s114 = sphi 0, %s100
      %s118 = sphi 0, %s118
      %s120 = sphi 0, %s118
      %s121 = sphi 0, %s120
      %s135 = sphi 0, %s121
      %s139 = sphi 0, %s139
      %s141 = sphi 0, %s139
      %s142 = sphi 0, %s141
      %s156 = sphi 0, %s142
      %s160 = sphi 0, %s160
      %s162 = sphi 0, %s160
      %s163 = sphi 0, %s162
      %s177 = sphi 0, %s163
      %s183 = sphi 0, %s185
      %s186 = sphi 0, %s183
      %s187 = sphi 0, %s186
      %s203 = sphi 0, %s187
    $region4: #{tpu_custom_call.1} parent=1 // loop_header_branch
      %24 = sbr.rel (%p22) target = $region8
    $region5: #{tpu_custom_call.1} parent=1 // loop_body
      %s26 = ssub.s32 %s21, 1
      %s27 = ssub.s32 %s21, 2
      %s28 = sadd.s32 %s21, 1
      %s29 = ssub.s32 %s21, %s28
      %p30 = scmp.eq.s32.totalorder %s29, 0
      %s32 = sadd.s32 %s31, 1
      %s33 = scalar_select %p30, %s31, %s32
      %p36 = pneg %p30
      %p37 = scmp.eq.s32.totalorder %s21, 3
      %p38 = por %p36, %p37
      %p39 = scmp.ne.s32.totalorder %s31, %s34
      %p40 = scmp.eq.s32.totalorder %s21, 0
      %p41 = por %p39, %p40
      %p42 = scmp.ne.s32.totalorder %s31, %s34
      %p43 = scmp.eq.s32.totalorder %s26, 3
      %p44 = por %p42, %p43
      %p45 = scmp.ne.s32.totalorder %s34, %s35
      %p46 = scmp.eq.s32.totalorder %s26, 0
      %p47 = por %p45, %p46
      %p48 = scmp.ne.s32.totalorder %s34, %s35
      %p49 = scmp.eq.s32.totalorder %s27, 3
      %p50 = por %p48, %p49
      %p52 = scmp.ne.s32.totalorder %s35, %s51
      %p53 = scmp.eq.s32.totalorder %s27, 0
      %p54 = por %p52, %p53
      %s56 = sadd.s32 %s55, 1
      %p59 = scmp.eq.s32.totalorder %s21, 3
      %p60 = scmp.ne.s32.totalorder %s55, %s57
      %p61 = scmp.eq.s32.totalorder %s21, 0
      %p62 = por %p60, %p61
      %p63 = scmp.ne.s32.totalorder %s55, %s57
      %p64 = scmp.eq.s32.totalorder %s26, 3
      %p65 = por %p63, %p64
      %p66 = scmp.ne.s32.totalorder %s57, %s58
      %p67 = scmp.eq.s32.totalorder %s26, 0
      %p68 = por %p66, %p67
      %p69 = scmp.ne.s32.totalorder %s57, %s58
      %p70 = scmp.eq.s32.totalorder %s27, 3
      %p71 = por %p69, %p70
      %p73 = scmp.ne.s32.totalorder %s58, %s72
      %p74 = scmp.eq.s32.totalorder %s27, 0
      %p75 = por %p73, %p74
      %s77 = sadd.s32 %s76, 1
      %p80 = scmp.eq.s32.totalorder %s21, 3
      %p81 = scmp.ne.s32.totalorder %s76, %s78
      %p82 = scmp.eq.s32.totalorder %s21, 0
      %p83 = por %p81, %p82
      %p84 = scmp.ne.s32.totalorder %s76, %s78
      %p85 = scmp.eq.s32.totalorder %s26, 3
      %p86 = por %p84, %p85
      %p87 = scmp.ne.s32.totalorder %s78, %s79
      %p88 = scmp.eq.s32.totalorder %s26, 0
      %p89 = por %p87, %p88
      %p90 = scmp.ne.s32.totalorder %s78, %s79
      %p91 = scmp.eq.s32.totalorder %s27, 3
      %p92 = por %p90, %p91
      %p94 = scmp.ne.s32.totalorder %s79, %s93
      %p95 = scmp.eq.s32.totalorder %s27, 0
      %p96 = por %p94, %p95
      %s98 = sadd.s32 %s97, 1
      %p101 = scmp.eq.s32.totalorder %s21, 3
      %p102 = scmp.ne.s32.totalorder %s97, %s99
      %p103 = scmp.eq.s32.totalorder %s21, 0
      %p104 = por %p102, %p103
      %p105 = scmp.ne.s32.totalorder %s97, %s99
      %p106 = scmp.eq.s32.totalorder %s26, 3
      %p107 = por %p105, %p106
      %p108 = scmp.ne.s32.totalorder %s99, %s100
      %p109 = scmp.eq.s32.totalorder %s26, 0
      %p110 = por %p108, %p109
      %p111 = scmp.ne.s32.totalorder %s99, %s100
      %p112 = scmp.eq.s32.totalorder %s27, 3
      %p113 = por %p111, %p112
      %p115 = scmp.ne.s32.totalorder %s100, %s114
      %p116 = scmp.eq.s32.totalorder %s27, 0
      %p117 = por %p115, %p116
      %s119 = sadd.s32 %s118, 1
      %p122 = scmp.eq.s32.totalorder %s21, 3
      %p123 = scmp.ne.s32.totalorder %s118, %s120
      %p124 = scmp.eq.s32.totalorder %s21, 0
      %p125 = por %p123, %p124
      %p126 = scmp.ne.s32.totalorder %s118, %s120
      %p127 = scmp.eq.s32.totalorder %s26, 3
      %p128 = por %p126, %p127
      %p129 = scmp.ne.s32.totalorder %s120, %s121
      %p130 = scmp.eq.s32.totalorder %s26, 0
      %p131 = por %p129, %p130
      %p132 = scmp.ne.s32.totalorder %s120, %s121
      %p133 = scmp.eq.s32.totalorder %s27, 3
      %p134 = por %p132, %p133
      %p136 = scmp.ne.s32.totalorder %s121, %s135
      %p137 = scmp.eq.s32.totalorder %s27, 0
      %p138 = por %p136, %p137
      %s140 = sadd.s32 %s139, 1
      %p143 = scmp.eq.s32.totalorder %s21, 3
      %p144 = scmp.ne.s32.totalorder %s139, %s141
      %p145 = scmp.eq.s32.totalorder %s21, 0
      %p146 = por %p144, %p145
      %p147 = scmp.ne.s32.totalorder %s139, %s141
      %p148 = scmp.eq.s32.totalorder %s26, 3
      %p149 = por %p147, %p148
      %p150 = scmp.ne.s32.totalorder %s141, %s142
      %p151 = scmp.eq.s32.totalorder %s26, 0
      %p152 = por %p150, %p151
      %p153 = scmp.ne.s32.totalorder %s141, %s142
      %p154 = scmp.eq.s32.totalorder %s27, 3
      %p155 = por %p153, %p154
      %p157 = scmp.ne.s32.totalorder %s142, %s156
      %p158 = scmp.eq.s32.totalorder %s27, 0
      %p159 = por %p157, %p158
      %s161 = sadd.s32 %s160, 1
      %p164 = scmp.eq.s32.totalorder %s21, 3
      %p165 = scmp.ne.s32.totalorder %s160, %s162
      %p166 = scmp.eq.s32.totalorder %s21, 0
      %p167 = por %p165, %p166
      %p168 = scmp.ne.s32.totalorder %s160, %s162
      %p169 = scmp.eq.s32.totalorder %s26, 3
      %p170 = por %p168, %p169
      %p171 = scmp.ne.s32.totalorder %s162, %s163
      %p172 = scmp.eq.s32.totalorder %s26, 0
      %p173 = por %p171, %p172
      %p174 = scmp.ne.s32.totalorder %s162, %s163
      %p175 = scmp.eq.s32.totalorder %s27, 3
      %p176 = por %p174, %p175
      %p178 = scmp.ne.s32.totalorder %s163, %s177
      %p179 = scmp.eq.s32.totalorder %s27, 0
      %p180 = por %p178, %p179
      %s181 = ssub.s32 %s21, %s28
      %p182 = scmp.eq.s32.totalorder %s181, 0
      %s184 = sadd.s32 %s183, 1
      %s185 = scalar_select %p182, %s183, %s184
      %p188 = pneg %p182
      %p189 = scmp.eq.s32.totalorder %s21, 3
      %p190 = por %p188, %p189
      %p191 = scmp.ne.s32.totalorder %s183, %s186
      %p192 = scmp.eq.s32.totalorder %s21, 0
      %p193 = por %p191, %p192
      %p194 = scmp.ne.s32.totalorder %s183, %s186
      %p195 = scmp.eq.s32.totalorder %s26, 3
      %p196 = por %p194, %p195
      %p197 = scmp.ne.s32.totalorder %s186, %s187
      %p198 = scmp.eq.s32.totalorder %s26, 0
      %p199 = por %p197, %p198
      %p200 = scmp.ne.s32.totalorder %s186, %s187
      %p201 = scmp.eq.s32.totalorder %s27, 3
      %p202 = por %p200, %p201
      %p204 = scmp.ne.s32.totalorder %s187, %s203
      %p205 = scmp.eq.s32.totalorder %s27, 0
      %p206 = por %p204, %p205
      %p207 = scmp.le.s32.totalorder 1, %s21
      %p208 = scmp.lt.s32.totalorder %s21, 5
      %p209 = pnand %p207, %p208
      %p210 = pneg %p209
      // Predicated region
      $region9: #{tpu_custom_call.1} parent=5 // pred_check
        _
      $region10: #{tpu_custom_call.1} parent=5 // pred_check_branch
        %212 = sbr.rel (%p209) target = $region12
      $region11: #{tpu_custom_call.1} parent=5 // pred_region
        %s213 = ssub.s32 %s21, 1
        // Predicated region
        $region13: #{tpu_custom_call.1} parent=11 // pred_check
          %p214 = pneg %p68
        $region14: #{tpu_custom_call.1} parent=11 // pred_check_branch
          %216 = sbr.rel (%p214) target = $region16
        $region15: #{tpu_custom_call.1} parent=11 // pred_region
          %s218 = ssub.s32 2048, 2048
          %219 = vsyncadd [#allocation6], %s218
          %s220 = sshll.u32 [#allocation5], 4
          %s221 = int_to_ptr.vmem [resolvable:$true] %s220
          %226 = dma.hbm_to_vmem [thread:$0]  %s1, 2048, %s221, [#allocation6], 128, 128, 8
        $region16: #{tpu_custom_call.1} parent=11 // pred_fallthru
          _
        // Predicated region
        $region17: #{tpu_custom_call.1} parent=11 // pred_check
          %p227 = pneg %p89
        $region18: #{tpu_custom_call.1} parent=11 // pred_check_branch
          %229 = sbr.rel (%p227) target = $region20
        $region19: #{tpu_custom_call.1} parent=11 // pred_region
          _
        $region20: #{tpu_custom_call.1} parent=11 // pred_fallthru
          _
        // Predicated region
        $region21: #{tpu_custom_call.1} parent=11 // pred_check
          %p230 = pneg %p110
        $region22: #{tpu_custom_call.1} parent=11 // pred_check_branch
          %232 = sbr.rel (%p230) target = $region24
        $region23: #{tpu_custom_call.1} parent=11 // pred_region
          %s234 = ssub.s32 192, 192
          %235 = vsyncadd [#allocation6], %s234
          %s236 = sshll.u32 [#allocation7], 4
          %s237 = int_to_ptr.vmem [resolvable:$true] %s236
          %242 = dma.hbm_to_vmem [thread:$0]  %s3, 192, %s237, [#allocation6], 64, 64, 4
        $region24: #{tpu_custom_call.1} parent=11 // pred_fallthru
          _
        // Predicated region
        $region25: #{tpu_custom_call.1} parent=11 // pred_check
          %p243 = pneg %p131
        $region26: #{tpu_custom_call.1} parent=11 // pred_check_branch
          %245 = sbr.rel (%p243) target = $region28
        $region27: #{tpu_custom_call.1} parent=11 // pred_region
          _
        $region28: #{tpu_custom_call.1} parent=11 // pred_fallthru
          _
        // Predicated region
        $region29: #{tpu_custom_call.1} parent=11 // pred_check
          %p246 = pneg %p152
        $region30: #{tpu_custom_call.1} parent=11 // pred_check_branch
          %248 = sbr.rel (%p246) target = $region32
        $region31: #{tpu_custom_call.1} parent=11 // pred_region
          %s250 = ssub.s32 2048, 2048
          %251 = vsyncadd [#allocation9], %s250
          %s252 = sshll.u32 [#allocation8], 4
          %s253 = int_to_ptr.vmem [resolvable:$true] %s252
          %258 = dma.hbm_to_vmem [thread:$0]  %s5, 2048, %s253, [#allocation9], 128, 128, 8
        $region32: #{tpu_custom_call.1} parent=11 // pred_fallthru
          _
        // Predicated region
        $region33: #{tpu_custom_call.1} parent=11 // pred_check
          %p259 = pneg %p173
        $region34: #{tpu_custom_call.1} parent=11 // pred_check_branch
          %261 = sbr.rel (%p259) target = $region36
        $region35: #{tpu_custom_call.1} parent=11 // pred_region
          _
        $region36: #{tpu_custom_call.1} parent=11 // pred_fallthru
          _
      $region12: #{tpu_custom_call.1} parent=5 // pred_fallthru
        _
      %p262 = scmp.lt.s32.totalorder %s21, 4
      // Predicated region
      $region37: #{tpu_custom_call.1} parent=5 // pred_check
        %p263 = pneg %p262
      $region38: #{tpu_custom_call.1} parent=5 // pred_check_branch
        %265 = sbr.rel (%p263) target = $region40
      $region39: #{tpu_custom_call.1} parent=5 // pred_region
        // Predicated region
        $region41: #{tpu_custom_call.1} parent=39 // pred_check
          %p266 = pneg %p41
        $region42: #{tpu_custom_call.1} parent=39 // pred_check_branch
          %268 = sbr.rel (%p266) target = $region44
        $region43: #{tpu_custom_call.1} parent=39 // pred_region
          %s269 = sand.u32 %s31, 1
          %s270 = scalar_lea.sflag [#allocation3], %s269
          %s271 = sand.u32 %s31, 1
          %s272 = smul.addr %s271, 240
          %s273 = scalar_lea.vmem [#allocation2], %s272
          %s275 = ssub.s32 3840, 3840
          %276 = vsyncadd %s270, %s275
          %s277 = smul.addr %s21, 30
          %s278 = smul.addr %s277, 128
          %s279 = scalar_lea.hbm %s0, %s278
          %s280 = sshll.u32 %s273, 4
          %s281 = int_to_ptr.vmem [resolvable:$true] %s280
          %286 = dma.hbm_to_vmem [thread:$0]  %s279, 3840, %s281, %s270, 128, 128, 8
        $region44: #{tpu_custom_call.1} parent=39 // pred_fallthru
          _
      $region40: #{tpu_custom_call.1} parent=5 // pred_fallthru
        _
      %p287 = scmp.le.s32.totalorder 1, %s21
      %p288 = scmp.lt.s32.totalorder %s21, 5
      %p289 = pnand %p287, %p288
      %p290 = pneg %p289
      // Predicated region
      $region45: #{tpu_custom_call.1} parent=5 // pred_check
        _
      $region46: #{tpu_custom_call.1} parent=5 // pred_check_branch
        %292 = sbr.rel (%p289) target = $region48
      $region47: #{tpu_custom_call.1} parent=5 // pred_region
        %s293 = ssub.s32 %s21, 1
        %s294 = sand.u32 %s34, 1
        %s295 = scalar_lea.sflag [#allocation3], %s294
        %s296 = sand.u32 %s34, 1
        %s297 = smul.addr %s296, 240
        %s298 = scalar_lea.vmem [#allocation2], %s297
        // Predicated region
        $region49: #{tpu_custom_call.1} parent=47 // pred_check
          %p299 = pneg %p47
        $region50: #{tpu_custom_call.1} parent=47 // pred_check_branch
          %301 = sbr.rel (%p299) target = $region52
        $region51: #{tpu_custom_call.1} parent=47 // pred_region
          %302 = dma.done %s295, 3840
        $region52: #{tpu_custom_call.1} parent=47 // pred_fallthru
          _
        // Predicated region
        $region53: #{tpu_custom_call.1} parent=47 // pred_check
          %p303 = pneg %p68
        $region54: #{tpu_custom_call.1} parent=47 // pred_check_branch
          %305 = sbr.rel (%p303) target = $region56
        $region55: #{tpu_custom_call.1} parent=47 // pred_region
          %306 = dma.done [#allocation6], 2048
        $region56: #{tpu_custom_call.1} parent=47 // pred_fallthru
          _
        // Predicated region
        $region57: #{tpu_custom_call.1} parent=47 // pred_check
          %p307 = pneg %p110
        $region58: #{tpu_custom_call.1} parent=47 // pred_check_branch
          %309 = sbr.rel (%p307) target = $region60
        $region59: #{tpu_custom_call.1} parent=47 // pred_region
          %310 = dma.done [#allocation6], 192
        $region60: #{tpu_custom_call.1} parent=47 // pred_fallthru
          _
        // Predicated region
        $region61: #{tpu_custom_call.1} parent=47 // pred_check
          %p311 = pneg %p152
        $region62: #{tpu_custom_call.1} parent=47 // pred_check_branch
          %313 = sbr.rel (%p311) target = $region64
        $region63: #{tpu_custom_call.1} parent=47 // pred_region
          %314 = dma.done [#allocation9], 2048
        $region64: #{tpu_custom_call.1} parent=47 // pred_fallthru
          _
        %s315 = sand.u32 %s34, 1
        %s316 = scalar_lea.sflag [#allocation3], %s315
        %s317 = sand.u32 %s34, 1
        %s318 = smul.addr %s317, 240
        %s319 = scalar_lea.vmem [#allocation2], %s318
        %p320 = pneg %p47
        %p321 = pneg %p44
        %p322 = pneg %p68
        %p323 = pneg %p65
        %p324 = pneg %p89
        %p325 = pneg %p86
        %p326 = pneg %p110
        %p327 = pneg %p107
        %p328 = pneg %p131
        %p329 = pneg %p128
        %p330 = pneg %p152
        %p331 = pneg %p149
        %p332 = pneg %p173
        %p333 = pneg %p170
        %p334 = pneg %p199
        %p335 = pneg %p196
        %s336 = sand.u32 %s186, 1
        %s337 = scalar_lea.sflag [#allocation4], %s336
        %s338 = sand.u32 %s186, 1
        %s339 = smul.addr %s338, 128
        %s340 = scalar_lea.vmem [#allocation10], %s339
        %v341 = vld [vmem:[%s298] sm:$0xff]
        %v342 = vld [vmem:[%s298 + $0x8] sm:$0xff]
        %v343 = vld [vmem:[%s298 + $0x10] sm:$0xff]
        %v344 = vld [vmem:[%s298 + $0x18] sm:$0xff]
        %v345 = vld [vmem:[%s298 + $0x20] sm:$0xff]
        %v346 = vld [vmem:[%s298 + $0x28] sm:$0xff]
        %v347 = vld [vmem:[%s298 + $0x30] sm:$0xff]
        %v348 = vld [vmem:[%s298 + $0x38] sm:$0xff]
        %v349 = vld [vmem:[%s298 + $0x40] sm:$0xff]
        %v350 = vld [vmem:[%s298 + $0x48] sm:$0xff]
        %v351 = vld [vmem:[%s298 + $0x50] sm:$0xff]
        %v352 = vld [vmem:[%s298 + $0x58] sm:$0xff]
        %v353 = vld [vmem:[%s298 + $0x60] sm:$0xff]
        %v354 = vld [vmem:[%s298 + $0x68] sm:$0xff]
        %v355 = vld [vmem:[%s298 + $0x70] sm:$0xff]
        %v356 = vld [vmem:[%s298 + $0x78] sm:$0xff]
        %v357 = vld [vmem:[%s298 + $0x80] sm:$0xff]
        %v358 = vld [vmem:[%s298 + $0x88] sm:$0xff]
        %v359 = vld [vmem:[%s298 + $0x90] sm:$0xff]
        %v360 = vld [vmem:[%s298 + $0x98] sm:$0xff]
        %v361 = vld [vmem:[%s298 + $0xa0] sm:$0xff]
        %v362 = vld [vmem:[%s298 + $0xa8] sm:$0xff]
        %v363 = vld [vmem:[%s298 + $0xb0] sm:$0xff]
        %v364 = vld [vmem:[%s298 + $0xb8] sm:$0xff]
        %v365 = vld [vmem:[%s298 + $0xc0] sm:$0xff]
        %v366 = vld [vmem:[%s298 + $0xc8] sm:$0xff]
        %v367 = vld [vmem:[%s298 + $0xd0] sm:$0xff]
        %v368 = vld [vmem:[%s298 + $0xd8] sm:$0xff]
        %v369 = vld [vmem:[%s298 + $0xe0] sm:$0xff]
        %v370 = vld [vmem:[%s298 + $0xe8] sm:$0xff]
        %v371 = vld [vmem:[#allocation5] sm:$0xff]
        %v372 = vld [vmem:[#allocation5 + $0x8] sm:$0xff]
        %v373 = vld [vmem:[#allocation5 + $0x10] sm:$0xff]
        %v374 = vld [vmem:[#allocation5 + $0x18] sm:$0xff]
        %v375 = vld [vmem:[#allocation5 + $0x20] sm:$0xff]
        %v376 = vld [vmem:[#allocation5 + $0x28] sm:$0xff]
        %v377 = vld [vmem:[#allocation5 + $0x30] sm:$0xff]
        %v378 = vld [vmem:[#allocation5 + $0x38] sm:$0xff]
        %v379 = vld [vmem:[#allocation5 + $0x40] sm:$0xff]
        %v380 = vld [vmem:[#allocation5 + $0x48] sm:$0xff]
        %v381 = vld [vmem:[#allocation5 + $0x50] sm:$0xff]
        %v382 = vld [vmem:[#allocation5 + $0x58] sm:$0xff]
        %v383 = vld [vmem:[#allocation5 + $0x60] sm:$0xff]
        %v384 = vld [vmem:[#allocation5 + $0x68] sm:$0xff]
        %v385 = vld [vmem:[#allocation5 + $0x70] sm:$0xff]
        %v386 = vld [vmem:[#allocation5 + $0x78] sm:$0xff]
        %v387 = vld [vmem:[%s2] sm:$0x1]
        %v389 = vlaneseq
        %v390 = vshrl.u32 %v389, 7
        %v391 = vsub.s32 0, %v390
        %v392 = vrot.slane %v387, %v391
        %394 = vmatprep.subr.mxu0 0.0
        %395 = vmatpush1.msra.mxu0 %v371
        %396 = vmatprep.subr.mxu0 0.0
        %397 = vmatpush1.msra.mxu0 %v372
        %398 = vmatprep.subr.mxu0 0.0
        %399 = vmatpush1.msra.mxu0 %v373
        %400 = vmatprep.subr.mxu0 0.0
        %401 = vmatpush1.msra.mxu0 %v374
        %402 = vmatprep.subr.mxu0 0.0
        %403 = vmatpush1.msra.mxu0 %v375
        %404 = vmatprep.subr.mxu0 0.0
        %405 = vmatpush1.msra.mxu0 %v376
        %406 = vmatprep.subr.mxu0 0.0
        %407 = vmatpush1.msra.mxu0 %v377
        %408 = vmatprep.subr.mxu0 0.0
        %409 = vmatpush1.msra.mxu0 %v378
        %410 = vmatprep.subr.mxu0 0.0
        %411 = vmatpush1.msra.mxu0 %v379
        %412 = vmatprep.subr.mxu0 0.0
        %413 = vmatpush1.msra.mxu0 %v380
        %414 = vmatprep.subr.mxu0 0.0
        %415 = vmatpush1.msra.mxu0 %v381
        %416 = vmatprep.subr.mxu0 0.0
        %417 = vmatpush1.msra.mxu0 %v382
        %418 = vmatprep.subr.mxu0 0.0
        %419 = vmatpush1.msra.mxu0 %v383
        %420 = vmatprep.subr.mxu0 0.0
        %421 = vmatpush1.msra.mxu0 %v384
        %422 = vmatprep.subr.mxu0 0.0
        %423 = vmatpush1.msra.mxu0 %v385
        %424 = vmatprep.subr.mxu0 0.0
        %425 = vmatpush1.msra.mxu0 %v386
        %426 = vmatprep.subr.mxu0 0.0
        %427 = vmatpush1.msra.mxu0 0.0
        %428 = vmatprep.subr.mxu0 0.0
        %429 = vmatpush1.msra.mxu0 0.0
        %430 = vmatprep.subr.mxu0 0.0
        %431 = vmatpush1.msra.mxu0 0.0
        %432 = vmatprep.subr.mxu0 0.0
        %433 = vmatpush1.msra.mxu0 0.0
        %434 = vmatprep.subr.mxu0 0.0
        %435 = vmatpush1.msra.mxu0 0.0
        %436 = vmatprep.subr.mxu0 0.0
        %437 = vmatpush1.msra.mxu0 0.0
        %438 = vmatprep.subr.mxu0 0.0
        %439 = vmatpush1.msra.mxu0 0.0
        %440 = vmatprep.subr.mxu0 0.0
        %441 = vmatpush1.msra.mxu0 0.0
        %442 = vmatprep.subr.mxu0 0.0
        %443 = vmatpush1.msra.mxu0 0.0
        %444 = vmatprep.subr.mxu0 0.0
        %445 = vmatpush1.msra.mxu0 0.0
        %446 = vmatprep.subr.mxu0 0.0
        %447 = vmatpush1.msra.mxu0 0.0
        %448 = vmatprep.subr.mxu0 0.0
        %449 = vmatpush1.msra.mxu0 0.0
        %450 = vmatprep.subr.mxu0 0.0
        %451 = vmatpush1.msra.mxu0 0.0
        %452 = vmatprep.subr.mxu0 0.0
        %453 = vmatpush1.msra.mxu0 0.0
        %454 = vmatprep.subr.mxu0 0.0
        %455 = vmatpush1.msra.mxu0 0.0
        %456 = vmatprep.subr.mxu0 0.0
        %457 = vmatpush1.msra.mxu0 0.0
        %458 = vmatprep.mubr.f32.mxu0 0.0
        %459 = vmatmul.mubr.f32.gmra.mrb[0].mxu0 %v341
        %v460 = vpop.f32.mrb[0].mxu0
        %v461 = vadd.f32 %v392, %v460
        %v462 = vpop.f32.mrb[0].mxu0
        %463 = vmatprep.mubr.f32.mxu0 0.0
        %464 = vmatmul.mubr.f32.gmra.mrb[0].mxu0 %v342
        %v465 = vpop.f32.mrb[0].mxu0
        %v466 = vadd.f32 %v392, %v465
        %v467 = vpop.f32.mrb[0].mxu0
        %468 = vmatprep.mubr.f32.mxu0 0.0
        %469 = vmatmul.mubr.f32.gmra.mrb[0].mxu0 %v343
        %v470 = vpop.f32.mrb[0].mxu0
        %v471 = vadd.f32 %v392, %v470
        %v472 = vpop.f32.mrb[0].mxu0
        %473 = vmatprep.mubr.f32.mxu0 0.0
        %474 = vmatmul.mubr.f32.gmra.mrb[0].mxu0 %v344
        %v475 = vpop.f32.mrb[0].mxu0
        %v476 = vadd.f32 %v392, %v475
        %v477 = vpop.f32.mrb[0].mxu0
        %478 = vmatprep.mubr.f32.mxu0 0.0
        %479 = vmatmul.mubr.f32.gmra.mrb[0].mxu0 %v345
        %v480 = vpop.f32.mrb[0].mxu0
        %v481 = vadd.f32 %v392, %v480
        %v482 = vpop.f32.mrb[0].mxu0
        %483 = vmatprep.mubr.f32.mxu0 0.0
        %484 = vmatmul.mubr.f32.gmra.mrb[0].mxu0 %v346
        %v485 = vpop.f32.mrb[0].mxu0
        %v486 = vadd.f32 %v392, %v485
        %v487 = vpop.f32.mrb[0].mxu0
        %488 = vmatprep.mubr.f32.mxu0 0.0
        %489 = vmatmul.mubr.f32.gmra.mrb[0].mxu0 %v347
        %v490 = vpop.f32.mrb[0].mxu0
        %v491 = vadd.f32 %v392, %v490
        %v492 = vpop.f32.mrb[0].mxu0
        %493 = vmatprep.mubr.f32.mxu0 0.0
        %494 = vmatmul.mubr.f32.gmra.mrb[0].mxu0 %v348
        %v495 = vpop.f32.mrb[0].mxu0
        %v496 = vadd.f32 %v392, %v495
        %v497 = vpop.f32.mrb[0].mxu0
        %498 = vmatprep.mubr.f32.mxu0 0.0
        %499 = vmatmul.mubr.f32.gmra.mrb[0].mxu0 %v349
        %v500 = vpop.f32.mrb[0].mxu0
        %v501 = vadd.f32 %v392, %v500
        %v502 = vpop.f32.mrb[0].mxu0
        %503 = vmatprep.mubr.f32.mxu0 0.0
        %504 = vmatmul.mubr.f32.gmra.mrb[0].mxu0 %v350
        %v505 = vpop.f32.mrb[0].mxu0
        %v506 = vadd.f32 %v392, %v505
        %v507 = vpop.f32.mrb[0].mxu0
        %508 = vmatprep.mubr.f32.mxu0 0.0
        %509 = vmatmul.mubr.f32.gmra.mrb[0].mxu0 %v351
        %v510 = vpop.f32.mrb[0].mxu0
        %v511 = vadd.f32 %v392, %v510
        %v512 = vpop.f32.mrb[0].mxu0
        %513 = vmatprep.mubr.f32.mxu0 0.0
        %514 = vmatmul.mubr.f32.gmra.mrb[0].mxu0 %v352
        %v515 = vpop.f32.mrb[0].mxu0
        %v516 = vadd.f32 %v392, %v515
        %v517 = vpop.f32.mrb[0].mxu0
        %518 = vmatprep.mubr.f32.mxu0 0.0
        %519 = vmatmul.mubr.f32.gmra.mrb[0].mxu0 %v353
        %v520 = vpop.f32.mrb[0].mxu0
        %v521 = vadd.f32 %v392, %v520
        %v522 = vpop.f32.mrb[0].mxu0
        %523 = vmatprep.mubr.f32.mxu0 0.0
        %524 = vmatmul.mubr.f32.gmra.mrb[0].mxu0 %v354
        %v525 = vpop.f32.mrb[0].mxu0
        %v526 = vadd.f32 %v392, %v525
        %v527 = vpop.f32.mrb[0].mxu0
        %528 = vmatprep.mubr.f32.mxu0 0.0
        %529 = vmatmul.mubr.f32.gmra.mrb[0].mxu0 %v355
        %v530 = vpop.f32.mrb[0].mxu0
        %v531 = vadd.f32 %v392, %v530
        %v532 = vpop.f32.mrb[0].mxu0
        %533 = vmatprep.mubr.f32.mxu0 0.0
        %534 = vmatmul.mubr.f32.gmra.mrb[0].mxu0 %v356
        %v535 = vpop.f32.mrb[0].mxu0
        %v536 = vadd.f32 %v392, %v535
        %v537 = vpop.f32.mrb[0].mxu0
        %538 = vmatprep.mubr.f32.mxu0 0.0
        %539 = vmatmul.mubr.f32.gmra.mrb[0].mxu0 %v357
        %v540 = vpop.f32.mrb[0].mxu0
        %v541 = vadd.f32 %v392, %v540
        %v542 = vpop.f32.mrb[0].mxu0
        %543 = vmatprep.mubr.f32.mxu0 0.0
        %544 = vmatmul.mubr.f32.gmra.mrb[0].mxu0 %v358
        %v545 = vpop.f32.mrb[0].mxu0
        %v546 = vadd.f32 %v392, %v545
        %v547 = vpop.f32.mrb[0].mxu0
        %548 = vmatprep.mubr.f32.mxu0 0.0
        %549 = vmatmul.mubr.f32.gmra.mrb[0].mxu0 %v359
        %v550 = vpop.f32.mrb[0].mxu0
        %v551 = vadd.f32 %v392, %v550
        %v552 = vpop.f32.mrb[0].mxu0
        %553 = vmatprep.mubr.f32.mxu0 0.0
        %554 = vmatmul.mubr.f32.gmra.mrb[0].mxu0 %v360
        %v555 = vpop.f32.mrb[0].mxu0
        %v556 = vadd.f32 %v392, %v555
        %v557 = vpop.f32.mrb[0].mxu0
        %558 = vmatprep.mubr.f32.mxu0 0.0
        %559 = vmatmul.mubr.f32.gmra.mrb[0].mxu0 %v361
        %v560 = vpop.f32.mrb[0].mxu0
        %v561 = vadd.f32 %v392, %v560
        %v562 = vpop.f32.mrb[0].mxu0
        %563 = vmatprep.mubr.f32.mxu0 0.0
        %564 = vmatmul.mubr.f32.gmra.mrb[0].mxu0 %v362
        %v565 = vpop.f32.mrb[0].mxu0
        %v566 = vadd.f32 %v392, %v565
        %v567 = vpop.f32.mrb[0].mxu0
        %568 = vmatprep.mubr.f32.mxu0 0.0
        %569 = vmatmul.mubr.f32.gmra.mrb[0].mxu0 %v363
        %v570 = vpop.f32.mrb[0].mxu0
        %v571 = vadd.f32 %v392, %v570
        %v572 = vpop.f32.mrb[0].mxu0
        %573 = vmatprep.mubr.f32.mxu0 0.0
        %574 = vmatmul.mubr.f32.gmra.mrb[0].mxu0 %v364
        %v575 = vpop.f32.mrb[0].mxu0
        %v576 = vadd.f32 %v392, %v575
        %v577 = vpop.f32.mrb[0].mxu0
        %578 = vmatprep.mubr.f32.mxu0 0.0
        %579 = vmatmul.mubr.f32.gmra.mrb[0].mxu0 %v365
        %v580 = vpop.f32.mrb[0].mxu0
        %v581 = vadd.f32 %v392, %v580
        %v582 = vpop.f32.mrb[0].mxu0
        %583 = vmatprep.mubr.f32.mxu0 0.0
        %584 = vmatmul.mubr.f32.gmra.mrb[0].mxu0 %v366
        %v585 = vpop.f32.mrb[0].mxu0
        %v586 = vadd.f32 %v392, %v585
        %v587 = vpop.f32.mrb[0].mxu0
        %588 = vmatprep.mubr.f32.mxu0 0.0
        %589 = vmatmul.mubr.f32.gmra.mrb[0].mxu0 %v367
        %v590 = vpop.f32.mrb[0].mxu0
        %v591 = vadd.f32 %v392, %v590
        %v592 = vpop.f32.mrb[0].mxu0
        %593 = vmatprep.mubr.f32.mxu0 0.0
        %594 = vmatmul.mubr.f32.gmra.mrb[0].mxu0 %v368
        %v595 = vpop.f32.mrb[0].mxu0
        %v596 = vadd.f32 %v392, %v595
        %v597 = vpop.f32.mrb[0].mxu0
        %598 = vmatprep.mubr.f32.mxu0 0.0
        %599 = vmatmul.mubr.f32.gmra.mrb[0].mxu0 %v369
        %v600 = vpop.f32.mrb[0].mxu0
        %v601 = vadd.f32 %v392, %v600
        %v602 = vpop.f32.mrb[0].mxu0
        %603 = vmatprep.mubr.f32.mxu0 0.0
        %604 = vmatmul.mubr.f32.gmra.mrb[0].mxu0 %v370
        %v605 = vpop.f32.mrb[0].mxu0
        %v606 = vadd.f32 %v392, %v605
        %v607 = vpop.f32.mrb[0].mxu0
        %608 = vdwg.mxu0
        %v609 = vmax.f32 %v461, 0.0
        %v610 = vmax.f32 %v466, 0.0
        %v611 = vmax.f32 %v471, 0.0
        %v612 = vmax.f32 %v476, 0.0
        %v613 = vmax.f32 %v481, 0.0
        %v614 = vmax.f32 %v486, 0.0
        %v615 = vmax.f32 %v491, 0.0
        %v616 = vmax.f32 %v496, 0.0
        %v617 = vmax.f32 %v501, 0.0
        %v618 = vmax.f32 %v506, 0.0
        %v619 = vmax.f32 %v511, 0.0
        %v620 = vmax.f32 %v516, 0.0
        %v621 = vmax.f32 %v521, 0.0
        %v622 = vmax.f32 %v526, 0.0
        %v623 = vmax.f32 %v531, 0.0
        %v624 = vmax.f32 %v536, 0.0
        %v625 = vmax.f32 %v541, 0.0
        %v626 = vmax.f32 %v546, 0.0
        %v627 = vmax.f32 %v551, 0.0
        %v628 = vmax.f32 %v556, 0.0
        %v629 = vmax.f32 %v561, 0.0
        %v630 = vmax.f32 %v566, 0.0
        %v631 = vmax.f32 %v571, 0.0
        %v632 = vmax.f32 %v576, 0.0
        %v633 = vmax.f32 %v581, 0.0
        %v634 = vmax.f32 %v586, 0.0
        %v635 = vmax.f32 %v591, 0.0
        %v636 = vmax.f32 %v596, 0.0
        %v637 = vmax.f32 %v601, 0.0
        %v638 = vmax.f32 %v606, 0.0
        %v639 = vmin.f32 %v609, 6.0
        %v640 = vmin.f32 %v610, 6.0
        %v641 = vmin.f32 %v611, 6.0
        %v642 = vmin.f32 %v612, 6.0
        %v643 = vmin.f32 %v613, 6.0
        %v644 = vmin.f32 %v614, 6.0
        %v645 = vmin.f32 %v615, 6.0
        %v646 = vmin.f32 %v616, 6.0
        %v647 = vmin.f32 %v617, 6.0
        %v648 = vmin.f32 %v618, 6.0
        %v649 = vmin.f32 %v619, 6.0
        %v650 = vmin.f32 %v620, 6.0
        %v651 = vmin.f32 %v621, 6.0
        %v652 = vmin.f32 %v622, 6.0
        %v653 = vmin.f32 %v623, 6.0
        %v654 = vmin.f32 %v624, 6.0
        %v655 = vmin.f32 %v625, 6.0
        %v656 = vmin.f32 %v626, 6.0
        %v657 = vmin.f32 %v627, 6.0
        %v658 = vmin.f32 %v628, 6.0
        %v659 = vmin.f32 %v629, 6.0
        %v660 = vmin.f32 %v630, 6.0
        %v661 = vmin.f32 %v631, 6.0
        %v662 = vmin.f32 %v632, 6.0
        %v663 = vmin.f32 %v633, 6.0
        %v664 = vmin.f32 %v634, 6.0
        %v665 = vmin.f32 %v635, 6.0
        %v666 = vmin.f32 %v636, 6.0
        %v667 = vmin.f32 %v637, 6.0
        %v668 = vmin.f32 %v638, 6.0
        %p669 = scmp.lt.s32.totalorder %s26, 0
        %s670 = ssub.s32 0, %s26
        %s671 = scalar_select %p669, %s670, %s26
        %s672 = sand.u32 %s671, 1
        %s673 = ssub.s32 0, %s672
        %s674 = scalar_select %p669, %s673, %s672
        %p675 = scmp.ne.s32.totalorder %s674, 0
        %p676 = scmp.lt.s32.totalorder %s674, 0
        %p677 = pnand %p676, %p675
        %p678 = pneg %p677
        %s679 = sadd.s32 %s674, 2
        %s680 = scalar_select %p678, %s679, %s674
        %s681 = smul.u32 %s680, 8
        %v682 = vlaneseq
        %v683 = vshrl.u32 %v682, 7
        %v684 = vadd.s32 %v683, 8
        %v685 = vadd.s32 %v683, 16
        %v686 = vstv %s681
        %v687 = vadd.s32 %v686, 1
        %v688 = vadd.s32 %v686, 2
        %v689 = vadd.s32 %v686, 3
        %v690 = vadd.s32 %v686, 4
        %v691 = vadd.s32 %v686, 5
        %v692 = vadd.s32 %v686, 6
        %v693 = vadd.s32 %v686, 7
        %v694 = vadd.s32 %v686, 8
        %v695 = vadd.s32 %v686, 9
        %vm696 = vcmp.ge.s32.totalorder %v686, 1
        %vm697 = vcmp.ge.s32.totalorder %v687, 1
        %vm698 = vcmp.ge.s32.totalorder %v688, 1
        %vm699 = vcmp.ge.s32.totalorder %v689, 1
        %vm700 = vcmp.ge.s32.totalorder %v690, 1
        %vm701 = vcmp.ge.s32.totalorder %v691, 1
        %vm702 = vcmp.ge.s32.totalorder %v692, 1
        %vm703 = vcmp.ge.s32.totalorder %v693, 1
        %vm704 = vcmp.ge.s32.totalorder %v694, 1
        %vm705 = vcmp.ge.s32.totalorder %v695, 1
        %vm706 = vcmp.le.s32.totalorder %v686, 16
        %vm707 = vcmp.le.s32.totalorder %v687, 16
        %vm708 = vcmp.le.s32.totalorder %v688, 16
        %vm709 = vcmp.le.s32.totalorder %v689, 16
        %vm710 = vcmp.le.s32.totalorder %v690, 16
        %vm711 = vcmp.le.s32.totalorder %v691, 16
        %vm712 = vcmp.le.s32.totalorder %v692, 16
        %vm713 = vcmp.le.s32.totalorder %v693, 16
        %vm714 = vcmp.le.s32.totalorder %v694, 16
        %vm715 = vcmp.le.s32.totalorder %v695, 16
        %vm716 = vmand %vm696, %vm706
        %vm717 = vmand %vm697, %vm707
        %vm718 = vmand %vm698, %vm708
        %vm719 = vmand %vm699, %vm709
        %vm720 = vmand %vm700, %vm710
        %vm721 = vmand %vm701, %vm711
        %vm722 = vmand %vm702, %vm712
        %vm723 = vmand %vm703, %vm713
        %vm724 = vmand %vm704, %vm714
        %vm725 = vmand %vm705, %vm715
        %vm726 = vcmp.ge.s32.totalorder %v683, 1
        %vm727 = vcmp.ge.s32.totalorder %v684, 1
        %vm728 = vcmp.ge.s32.totalorder %v685, 1
        %vm729 = vmand %vm716, %vm726
        %vm730 = vmand %vm716, %vm727
        %vm731 = vmand %vm716, %vm728
        %vm732 = vmand %vm717, %vm726
        %vm733 = vmand %vm717, %vm727
        %vm734 = vmand %vm717, %vm728
        %vm735 = vmand %vm718, %vm726
        %vm736 = vmand %vm718, %vm727
        %vm737 = vmand %vm718, %vm728
        %vm738 = vmand %vm719, %vm726
        %vm739 = vmand %vm719, %vm727
        %vm740 = vmand %vm719, %vm728
        %vm741 = vmand %vm720, %vm726
        %vm742 = vmand %vm720, %vm727
        %vm743 = vmand %vm720, %vm728
        %vm744 = vmand %vm721, %vm726
        %vm745 = vmand %vm721, %vm727
        %vm746 = vmand %vm721, %vm728
        %vm747 = vmand %vm722, %vm726
        %vm748 = vmand %vm722, %vm727
        %vm749 = vmand %vm722, %vm728
        %vm750 = vmand %vm723, %vm726
        %vm751 = vmand %vm723, %vm727
        %vm752 = vmand %vm723, %vm728
        %vm753 = vmand %vm724, %vm726
        %vm754 = vmand %vm724, %vm727
        %vm755 = vmand %vm724, %vm728
        %vm756 = vmand %vm725, %vm726
        %vm757 = vmand %vm725, %vm727
        %vm758 = vmand %vm725, %vm728
        %vm759 = vcmp.le.s32.totalorder %v683, 16
        %vm760 = vcmp.le.s32.totalorder %v684, 16
        %vm761 = vcmp.le.s32.totalorder %v685, 16
        %vm762 = vmand %vm729, %vm759
        %vm763 = vmand %vm730, %vm760
        %vm764 = vmand %vm731, %vm761
        %vm765 = vmand %vm732, %vm759
        %vm766 = vmand %vm733, %vm760
        %vm767 = vmand %vm734, %vm761
        %vm768 = vmand %vm735, %vm759
        %vm769 = vmand %vm736, %vm760
        %vm770 = vmand %vm737, %vm761
        %vm771 = vmand %vm738, %vm759
        %vm772 = vmand %vm739, %vm760
        %vm773 = vmand %vm740, %vm761
        %vm774 = vmand %vm741, %vm759
        %vm775 = vmand %vm742, %vm760
        %vm776 = vmand %vm743, %vm761
        %vm777 = vmand %vm744, %vm759
        %vm778 = vmand %vm745, %vm760
        %vm779 = vmand %vm746, %vm761
        %vm780 = vmand %vm747, %vm759
        %vm781 = vmand %vm748, %vm760
        %vm782 = vmand %vm749, %vm761
        %vm783 = vmand %vm750, %vm759
        %vm784 = vmand %vm751, %vm760
        %vm785 = vmand %vm752, %vm761
        %vm786 = vmand %vm753, %vm759
        %vm787 = vmand %vm754, %vm760
        %vm788 = vmand %vm755, %vm761
        %vm789 = vmand %vm756, %vm759
        %vm790 = vmand %vm757, %vm760
        %vm791 = vmand %vm758, %vm761
        %v792 = vsel %vm762, 1, 0
        %v793 = vsel %vm763, 1, 0
        %v794 = vsel %vm764, 1, 0
        %v795 = vsel %vm765, 1, 0
        %v796 = vsel %vm766, 1, 0
        %v797 = vsel %vm767, 1, 0
        %v798 = vsel %vm768, 1, 0
        %v799 = vsel %vm769, 1, 0
        %v800 = vsel %vm770, 1, 0
        %v801 = vsel %vm771, 1, 0
        %v802 = vsel %vm772, 1, 0
        %v803 = vsel %vm773, 1, 0
        %v804 = vsel %vm774, 1, 0
        %v805 = vsel %vm775, 1, 0
        %v806 = vsel %vm776, 1, 0
        %v807 = vsel %vm777, 1, 0
        %v808 = vsel %vm778, 1, 0
        %v809 = vsel %vm779, 1, 0
        %v810 = vsel %vm780, 1, 0
        %v811 = vsel %vm781, 1, 0
        %v812 = vsel %vm782, 1, 0
        %v813 = vsel %vm783, 1, 0
        %v814 = vsel %vm784, 1, 0
        %v815 = vsel %vm785, 1, 0
        %v816 = vsel %vm786, 1, 0
        %v817 = vsel %vm787, 1, 0
        %v818 = vsel %vm788, 1, 0
        %v819 = vsel %vm789, 1, 0
        %v820 = vsel %vm790, 1, 0
        %v821 = vsel %vm791, 1, 0
        %vm822 = vcmp.eq.s32.totalorder %v792, 1
        %vm823 = vcmp.eq.s32.totalorder %v793, 1
        %vm824 = vcmp.eq.s32.totalorder %v794, 1
        %vm825 = vcmp.eq.s32.totalorder %v795, 1
        %vm826 = vcmp.eq.s32.totalorder %v796, 1
        %vm827 = vcmp.eq.s32.totalorder %v797, 1
        %vm828 = vcmp.eq.s32.totalorder %v798, 1
        %vm829 = vcmp.eq.s32.totalorder %v799, 1
        %vm830 = vcmp.eq.s32.totalorder %v800, 1
        %vm831 = vcmp.eq.s32.totalorder %v801, 1
        %vm832 = vcmp.eq.s32.totalorder %v802, 1
        %vm833 = vcmp.eq.s32.totalorder %v803, 1
        %vm834 = vcmp.eq.s32.totalorder %v804, 1
        %vm835 = vcmp.eq.s32.totalorder %v805, 1
        %vm836 = vcmp.eq.s32.totalorder %v806, 1
        %vm837 = vcmp.eq.s32.totalorder %v807, 1
        %vm838 = vcmp.eq.s32.totalorder %v808, 1
        %vm839 = vcmp.eq.s32.totalorder %v809, 1
        %vm840 = vcmp.eq.s32.totalorder %v810, 1
        %vm841 = vcmp.eq.s32.totalorder %v811, 1
        %vm842 = vcmp.eq.s32.totalorder %v812, 1
        %vm843 = vcmp.eq.s32.totalorder %v813, 1
        %vm844 = vcmp.eq.s32.totalorder %v814, 1
        %vm845 = vcmp.eq.s32.totalorder %v815, 1
        %vm846 = vcmp.eq.s32.totalorder %v816, 1
        %vm847 = vcmp.eq.s32.totalorder %v817, 1
        %vm848 = vcmp.eq.s32.totalorder %v818, 1
        %vm849 = vcmp.eq.s32.totalorder %v819, 1
        %vm850 = vcmp.eq.s32.totalorder %v820, 1
        %vm851 = vcmp.eq.s32.totalorder %v821, 1
        %v852 = vsel %vm822, %v639, 0.0
        %v853 = vsel %vm823, %v640, 0.0
        %v854 = vsel %vm824, %v641, 0.0
        %v855 = vsel %vm825, %v642, 0.0
        %v856 = vsel %vm826, %v643, 0.0
        %v857 = vsel %vm827, %v644, 0.0
        %v858 = vsel %vm828, %v645, 0.0
        %v859 = vsel %vm829, %v646, 0.0
        %v860 = vsel %vm830, %v647, 0.0
        %v861 = vsel %vm831, %v648, 0.0
        %v862 = vsel %vm832, %v649, 0.0
        %v863 = vsel %vm833, %v650, 0.0
        %v864 = vsel %vm834, %v651, 0.0
        %v865 = vsel %vm835, %v652, 0.0
        %v866 = vsel %vm836, %v653, 0.0
        %v867 = vsel %vm837, %v654, 0.0
        %v868 = vsel %vm838, %v655, 0.0
        %v869 = vsel %vm839, %v656, 0.0
        %v870 = vsel %vm840, %v657, 0.0
        %v871 = vsel %vm841, %v658, 0.0
        %v872 = vsel %vm842, %v659, 0.0
        %v873 = vsel %vm843, %v660, 0.0
        %v874 = vsel %vm844, %v661, 0.0
        %v875 = vsel %vm845, %v662, 0.0
        %v876 = vsel %vm846, %v663, 0.0
        %v877 = vsel %vm847, %v664, 0.0
        %v878 = vsel %vm848, %v665, 0.0
        %v879 = vsel %vm849, %v666, 0.0
        %v880 = vsel %vm850, %v667, 0.0
        %v881 = vsel %vm851, %v668, 0.0
        %v882 = vld [vmem:[#allocation7] sm:$0x1]
        %v883 = vlaneseq
        %v884 = vshrl.u32 %v883, 7
        %v885 = vsub.s32 0, %v884
        %v886 = vrot.slane %v882, %v885
        %v887 = vmul.f32 %v852, %v886
        %v888 = vmul.f32 %v853, %v886
        %v889 = vmul.f32 %v855, %v886
        %v890 = vmul.f32 %v856, %v886
        %v891 = vmul.f32 %v858, %v886
        %v892 = vmul.f32 %v859, %v886
        %v893 = vmul.f32 %v861, %v886
        %v894 = vmul.f32 %v862, %v886
        %v895 = vmul.f32 %v864, %v886
        %v896 = vmul.f32 %v865, %v886
        %v897 = vmul.f32 %v867, %v886
        %v898 = vmul.f32 %v868, %v886
        %v899 = vmul.f32 %v870, %v886
        %v900 = vmul.f32 %v871, %v886
        %v901 = vmul.f32 %v873, %v886
        %v902 = vmul.f32 %v874, %v886
        %v903 = vadd.f32 %v887, 0.0
        %v904 = vadd.f32 %v888, 0.0
        %v905 = vadd.f32 %v889, 0.0
        %v906 = vadd.f32 %v890, 0.0
        %v907 = vadd.f32 %v891, 0.0
        %v908 = vadd.f32 %v892, 0.0
        %v909 = vadd.f32 %v893, 0.0
        %v910 = vadd.f32 %v894, 0.0
        %v911 = vadd.f32 %v895, 0.0
        %v912 = vadd.f32 %v896, 0.0
        %v913 = vadd.f32 %v897, 0.0
        %v914 = vadd.f32 %v898, 0.0
        %v915 = vadd.f32 %v899, 0.0
        %v916 = vadd.f32 %v900, 0.0
        %v917 = vadd.f32 %v901, 0.0
        %v918 = vadd.f32 %v902, 0.0
        %v919 = vld [vmem:[#allocation7 + $0x1] sm:$0x1]
        %v920 = vlaneseq
        %v921 = vshrl.u32 %v920, 7
        %v922 = vsub.s32 0, %v921
        %v923 = vrot.slane %v919, %v922
        %v924 = vmul.f32 %v852, %v923
        %v925 = vmul.f32 %v853, %v923
        %v926 = vmul.f32 %v854, %v923
        %v927 = vmul.f32 %v855, %v923
        %v928 = vmul.f32 %v856, %v923
        %v929 = vmul.f32 %v857, %v923
        %v930 = vmul.f32 %v858, %v923
        %v931 = vmul.f32 %v859, %v923
        %v932 = vmul.f32 %v860, %v923
        %v933 = vmul.f32 %v861, %v923
        %v934 = vmul.f32 %v862, %v923
        %v935 = vmul.f32 %v863, %v923
        %v936 = vmul.f32 %v864, %v923
        %v937 = vmul.f32 %v865, %v923
        %v938 = vmul.f32 %v866, %v923
        %v939 = vmul.f32 %v867, %v923
        %v940 = vmul.f32 %v868, %v923
        %v941 = vmul.f32 %v869, %v923
        %v942 = vmul.f32 %v870, %v923
        %v943 = vmul.f32 %v871, %v923
        %v944 = vmul.f32 %v872, %v923
        %v945 = vmul.f32 %v873, %v923
        %v946 = vmul.f32 %v874, %v923
        %v947 = vmul.f32 %v875, %v923
        %vm972 = vcmask 1046528
        %v973 = vrot.slane %v924, 1
        %v974 = vrot.slane %v925, 1
        %v975 = vsel %vm972, %v973, %v974
        %v976 = vrot.slane %v926, 1
        %v977 = vsel %vm972, %v974, %v976
        %v978 = vrot.slane %v927, 1
        %v979 = vrot.slane %v928, 1
        %v980 = vsel %vm972, %v978, %v979
        %v981 = vrot.slane %v929, 1
        %v982 = vsel %vm972, %v979, %v981
        %v983 = vrot.slane %v930, 1
        %v984 = vrot.slane %v931, 1
        %v985 = vsel %vm972, %v983, %v984
        %v986 = vrot.slane %v932, 1
        %v987 = vsel %vm972, %v984, %v986
        %v988 = vrot.slane %v933, 1
        %v989 = vrot.slane %v934, 1
        %v990 = vsel %vm972, %v988, %v989
        %v991 = vrot.slane %v935, 1
        %v992 = vsel %vm972, %v989, %v991
        %v993 = vrot.slane %v936, 1
        %v994 = vrot.slane %v937, 1
        %v995 = vsel %vm972, %v993, %v994
        %v996 = vrot.slane %v938, 1
        %v997 = vsel %vm972, %v994, %v996
        %v998 = vrot.slane %v939, 1
        %v999 = vrot.slane %v940, 1
        %v1000 = vsel %vm972, %v998, %v999
        %v1001 = vrot.slane %v941, 1
        %v1002 = vsel %vm972, %v999, %v1001
        %v1003 = vrot.slane %v942, 1
        %v1004 = vrot.slane %v943, 1
        %v1005 = vsel %vm972, %v1003, %v1004
        %v1006 = vrot.slane %v944, 1
        %v1007 = vsel %vm972, %v1004, %v1006
        %v1008 = vrot.slane %v945, 1
        %v1009 = vrot.slane %v946, 1
        %v1010 = vsel %vm972, %v1008, %v1009
        %v1011 = vrot.slane %v947, 1
        %v1012 = vsel %vm972, %v1009, %v1011
        %v1029 = vadd.f32 %v903, %v975
        %v1030 = vadd.f32 %v904, %v977
        %v1031 = vadd.f32 %v905, %v980
        %v1032 = vadd.f32 %v906, %v982
        %v1033 = vadd.f32 %v907, %v985
        %v1034 = vadd.f32 %v908, %v987
        %v1035 = vadd.f32 %v909, %v990
        %v1036 = vadd.f32 %v910, %v992
        %v1037 = vadd.f32 %v911, %v995
        %v1038 = vadd.f32 %v912, %v997
        %v1039 = vadd.f32 %v913, %v1000
        %v1040 = vadd.f32 %v914, %v1002
        %v1041 = vadd.f32 %v915, %v1005
        %v1042 = vadd.f32 %v916, %v1007
        %v1043 = vadd.f32 %v917, %v1010
        %v1044 = vadd.f32 %v918, %v1012
        %v1045 = vld [vmem:[#allocation7 + $0x2] sm:$0x1]
        %v1046 = vlaneseq
        %v1047 = vshrl.u32 %v1046, 7
        %v1048 = vsub.s32 0, %v1047
        %v1049 = vrot.slane %v1045, %v1048
        %v1050 = vmul.f32 %v852, %v1049
        %v1051 = vmul.f32 %v853, %v1049
        %v1052 = vmul.f32 %v854, %v1049
        %v1053 = vmul.f32 %v855, %v1049
        %v1054 = vmul.f32 %v856, %v1049
        %v1055 = vmul.f32 %v857, %v1049
        %v1056 = vmul.f32 %v858, %v1049
        %v1057 = vmul.f32 %v859, %v1049
        %v1058 = vmul.f32 %v860, %v1049
        %v1059 = vmul.f32 %v861, %v1049
        %v1060 = vmul.f32 %v862, %v1049
        %v1061 = vmul.f32 %v863, %v1049
        %v1062 = vmul.f32 %v864, %v1049
        %v1063 = vmul.f32 %v865, %v1049
        %v1064 = vmul.f32 %v866, %v1049
        %v1065 = vmul.f32 %v867, %v1049
        %v1066 = vmul.f32 %v868, %v1049
        %v1067 = vmul.f32 %v869, %v1049
        %v1068 = vmul.f32 %v870, %v1049
        %v1069 = vmul.f32 %v871, %v1049
        %v1070 = vmul.f32 %v872, %v1049
        %v1071 = vmul.f32 %v873, %v1049
        %v1072 = vmul.f32 %v874, %v1049
        %v1073 = vmul.f32 %v875, %v1049
        %vm1098 = vcmask 1045504
        %v1099 = vrot.slane %v1050, 2
        %v1100 = vrot.slane %v1051, 2
        %v1101 = vsel %vm1098, %v1099, %v1100
        %v1102 = vrot.slane %v1052, 2
        %v1103 = vsel %vm1098, %v1100, %v1102
        %v1104 = vrot.slane %v1053, 2
        %v1105 = vrot.slane %v1054, 2
        %v1106 = vsel %vm1098, %v1104, %v1105
        %v1107 = vrot.slane %v1055, 2
        %v1108 = vsel %vm1098, %v1105, %v1107
        %v1109 = vrot.slane %v1056, 2
        %v1110 = vrot.slane %v1057, 2
        %v1111 = vsel %vm1098, %v1109, %v1110
        %v1112 = vrot.slane %v1058, 2
        %v1113 = vsel %vm1098, %v1110, %v1112
        %v1114 = vrot.slane %v1059, 2
        %v1115 = vrot.slane %v1060, 2
        %v1116 = vsel %vm1098, %v1114, %v1115
        %v1117 = vrot.slane %v1061, 2
        %v1118 = vsel %vm1098, %v1115, %v1117
        %v1119 = vrot.slane %v1062, 2
        %v1120 = vrot.slane %v1063, 2
        %v1121 = vsel %vm1098, %v1119, %v1120
        %v1122 = vrot.slane %v1064, 2
        %v1123 = vsel %vm1098, %v1120, %v1122
        %v1124 = vrot.slane %v1065, 2
        %v1125 = vrot.slane %v1066, 2
        %v1126 = vsel %vm1098, %v1124, %v1125
        %v1127 = vrot.slane %v1067, 2
        %v1128 = vsel %vm1098, %v1125, %v1127
        %v1129 = vrot.slane %v1068, 2
        %v1130 = vrot.slane %v1069, 2
        %v1131 = vsel %vm1098, %v1129, %v1130
        %v1132 = vrot.slane %v1070, 2
        %v1133 = vsel %vm1098, %v1130, %v1132
        %v1134 = vrot.slane %v1071, 2
        %v1135 = vrot.slane %v1072, 2
        %v1136 = vsel %vm1098, %v1134, %v1135
        %v1137 = vrot.slane %v1073, 2
        %v1138 = vsel %vm1098, %v1135, %v1137
        %v1155 = vadd.f32 %v1029, %v1101
        %v1156 = vadd.f32 %v1030, %v1103
        %v1157 = vadd.f32 %v1031, %v1106
        %v1158 = vadd.f32 %v1032, %v1108
        %v1159 = vadd.f32 %v1033, %v1111
        %v1160 = vadd.f32 %v1034, %v1113
        %v1161 = vadd.f32 %v1035, %v1116
        %v1162 = vadd.f32 %v1036, %v1118
        %v1163 = vadd.f32 %v1037, %v1121
        %v1164 = vadd.f32 %v1038, %v1123
        %v1165 = vadd.f32 %v1039, %v1126
        %v1166 = vadd.f32 %v1040, %v1128
        %v1167 = vadd.f32 %v1041, %v1131
        %v1168 = vadd.f32 %v1042, %v1133
        %v1169 = vadd.f32 %v1043, %v1136
        %v1170 = vadd.f32 %v1044, %v1138
        %s1171 = scalar_lea.vmem [#allocation7], 4
        %v1172 = vld [vmem:[%s1171] sm:$0x1]
        %v1173 = vlaneseq
        %v1174 = vshrl.u32 %v1173, 7
        %v1175 = vsub.s32 0, %v1174
        %v1176 = vrot.slane %v1172, %v1175
        %v1177 = vmul.f32 %v855, %v1176
        %v1178 = vmul.f32 %v856, %v1176
        %v1179 = vmul.f32 %v858, %v1176
        %v1180 = vmul.f32 %v859, %v1176
        %v1181 = vmul.f32 %v861, %v1176
        %v1182 = vmul.f32 %v862, %v1176
        %v1183 = vmul.f32 %v864, %v1176
        %v1184 = vmul.f32 %v865, %v1176
        %v1185 = vmul.f32 %v867, %v1176
        %v1186 = vmul.f32 %v868, %v1176
        %v1187 = vmul.f32 %v870, %v1176
        %v1188 = vmul.f32 %v871, %v1176
        %v1189 = vmul.f32 %v873, %v1176
        %v1190 = vmul.f32 %v874, %v1176
        %v1191 = vmul.f32 %v876, %v1176
        %v1192 = vmul.f32 %v877, %v1176
        %v1193 = vadd.f32 %v1155, %v1177
        %v1194 = vadd.f32 %v1156, %v1178
        %v1195 = vadd.f32 %v1157, %v1179
        %v1196 = vadd.f32 %v1158, %v1180
        %v1197 = vadd.f32 %v1159, %v1181
        %v1198 = vadd.f32 %v1160, %v1182
        %v1199 = vadd.f32 %v1161, %v1183
        %v1200 = vadd.f32 %v1162, %v1184
        %v1201 = vadd.f32 %v1163, %v1185
        %v1202 = vadd.f32 %v1164, %v1186
        %v1203 = vadd.f32 %v1165, %v1187
        %v1204 = vadd.f32 %v1166, %v1188
        %v1205 = vadd.f32 %v1167, %v1189
        %v1206 = vadd.f32 %v1168, %v1190
        %v1207 = vadd.f32 %v1169, %v1191
        %v1208 = vadd.f32 %v1170, %v1192
        %v1209 = vld [vmem:[%s1171 + $0x1] sm:$0x1]
        %v1210 = vlaneseq
        %v1211 = vshrl.u32 %v1210, 7
        %v1212 = vsub.s32 0, %v1211
        %v1213 = vrot.slane %v1209, %v1212
        %v1214 = vmul.f32 %v855, %v1213
        %v1215 = vmul.f32 %v856, %v1213
        %v1216 = vmul.f32 %v857, %v1213
        %v1217 = vmul.f32 %v858, %v1213
        %v1218 = vmul.f32 %v859, %v1213
        %v1219 = vmul.f32 %v860, %v1213
        %v1220 = vmul.f32 %v861, %v1213
        %v1221 = vmul.f32 %v862, %v1213
        %v1222 = vmul.f32 %v863, %v1213
        %v1223 = vmul.f32 %v864, %v1213
        %v1224 = vmul.f32 %v865, %v1213
        %v1225 = vmul.f32 %v866, %v1213
        %v1226 = vmul.f32 %v867, %v1213
        %v1227 = vmul.f32 %v868, %v1213
        %v1228 = vmul.f32 %v869, %v1213
        %v1229 = vmul.f32 %v870, %v1213
        %v1230 = vmul.f32 %v871, %v1213
        %v1231 = vmul.f32 %v872, %v1213
        %v1232 = vmul.f32 %v873, %v1213
        %v1233 = vmul.f32 %v874, %v1213
        %v1234 = vmul.f32 %v875, %v1213
        %v1235 = vmul.f32 %v876, %v1213
        %v1236 = vmul.f32 %v877, %v1213
        %v1237 = vmul.f32 %v878, %v1213
        %v1262 = vrot.slane %v1214, 1
        %v1263 = vrot.slane %v1215, 1
        %v1264 = vsel %vm972, %v1262, %v1263
        %v1265 = vrot.slane %v1216, 1
        %v1266 = vsel %vm972, %v1263, %v1265
        %v1267 = vrot.slane %v1217, 1
        %v1268 = vrot.slane %v1218, 1
        %v1269 = vsel %vm972, %v1267, %v1268
        %v1270 = vrot.slane %v1219, 1
        %v1271 = vsel %vm972, %v1268, %v1270
        %v1272 = vrot.slane %v1220, 1
        %v1273 = vrot.slane %v1221, 1
        %v1274 = vsel %vm972, %v1272, %v1273
        %v1275 = vrot.slane %v1222, 1
        %v1276 = vsel %vm972, %v1273, %v1275
        %v1277 = vrot.slane %v1223, 1
        %v1278 = vrot.slane %v1224, 1
        %v1279 = vsel %vm972, %v1277, %v1278
        %v1280 = vrot.slane %v1225, 1
        %v1281 = vsel %vm972, %v1278, %v1280
        %v1282 = vrot.slane %v1226, 1
        %v1283 = vrot.slane %v1227, 1
        %v1284 = vsel %vm972, %v1282, %v1283
        %v1285 = vrot.slane %v1228, 1
        %v1286 = vsel %vm972, %v1283, %v1285
        %v1287 = vrot.slane %v1229, 1
        %v1288 = vrot.slane %v1230, 1
        %v1289 = vsel %vm972, %v1287, %v1288
        %v1290 = vrot.slane %v1231, 1
        %v1291 = vsel %vm972, %v1288, %v1290
        %v1292 = vrot.slane %v1232, 1
        %v1293 = vrot.slane %v1233, 1
        %v1294 = vsel %vm972, %v1292, %v1293
        %v1295 = vrot.slane %v1234, 1
        %v1296 = vsel %vm972, %v1293, %v1295
        %v1297 = vrot.slane %v1235, 1
        %v1298 = vrot.slane %v1236, 1
        %v1299 = vsel %vm972, %v1297, %v1298
        %v1300 = vrot.slane %v1237, 1
        %v1301 = vsel %vm972, %v1298, %v1300
        %v1318 = vadd.f32 %v1193, %v1264
        %v1319 = vadd.f32 %v1194, %v1266
        %v1320 = vadd.f32 %v1195, %v1269
        %v1321 = vadd.f32 %v1196, %v1271
        %v1322 = vadd.f32 %v1197, %v1274
        %v1323 = vadd.f32 %v1198, %v1276
        %v1324 = vadd.f32 %v1199, %v1279
        %v1325 = vadd.f32 %v1200, %v1281
        %v1326 = vadd.f32 %v1201, %v1284
        %v1327 = vadd.f32 %v1202, %v1286
        %v1328 = vadd.f32 %v1203, %v1289
        %v1329 = vadd.f32 %v1204, %v1291
        %v1330 = vadd.f32 %v1205, %v1294
        %v1331 = vadd.f32 %v1206, %v1296
        %v1332 = vadd.f32 %v1207, %v1299
        %v1333 = vadd.f32 %v1208, %v1301
        %v1334 = vld [vmem:[%s1171 + $0x2] sm:$0x1]
        %v1335 = vlaneseq
        %v1336 = vshrl.u32 %v1335, 7
        %v1337 = vsub.s32 0, %v1336
        %v1338 = vrot.slane %v1334, %v1337
        %v1339 = vmul.f32 %v855, %v1338
        %v1340 = vmul.f32 %v856, %v1338
        %v1341 = vmul.f32 %v857, %v1338
        %v1342 = vmul.f32 %v858, %v1338
        %v1343 = vmul.f32 %v859, %v1338
        %v1344 = vmul.f32 %v860, %v1338
        %v1345 = vmul.f32 %v861, %v1338
        %v1346 = vmul.f32 %v862, %v1338
        %v1347 = vmul.f32 %v863, %v1338
        %v1348 = vmul.f32 %v864, %v1338
        %v1349 = vmul.f32 %v865, %v1338
        %v1350 = vmul.f32 %v866, %v1338
        %v1351 = vmul.f32 %v867, %v1338
        %v1352 = vmul.f32 %v868, %v1338
        %v1353 = vmul.f32 %v869, %v1338
        %v1354 = vmul.f32 %v870, %v1338
        %v1355 = vmul.f32 %v871, %v1338
        %v1356 = vmul.f32 %v872, %v1338
        %v1357 = vmul.f32 %v873, %v1338
        %v1358 = vmul.f32 %v874, %v1338
        %v1359 = vmul.f32 %v875, %v1338
        %v1360 = vmul.f32 %v876, %v1338
        %v1361 = vmul.f32 %v877, %v1338
        %v1362 = vmul.f32 %v878, %v1338
        %v1387 = vrot.slane %v1339, 2
        %v1388 = vrot.slane %v1340, 2
        %v1389 = vsel %vm1098, %v1387, %v1388
        %v1390 = vrot.slane %v1341, 2
        %v1391 = vsel %vm1098, %v1388, %v1390
        %v1392 = vrot.slane %v1342, 2
        %v1393 = vrot.slane %v1343, 2
        %v1394 = vsel %vm1098, %v1392, %v1393
        %v1395 = vrot.slane %v1344, 2
        %v1396 = vsel %vm1098, %v1393, %v1395
        %v1397 = vrot.slane %v1345, 2
        %v1398 = vrot.slane %v1346, 2
        %v1399 = vsel %vm1098, %v1397, %v1398
        %v1400 = vrot.slane %v1347, 2
        %v1401 = vsel %vm1098, %v1398, %v1400
        %v1402 = vrot.slane %v1348, 2
        %v1403 = vrot.slane %v1349, 2
        %v1404 = vsel %vm1098, %v1402, %v1403
        %v1405 = vrot.slane %v1350, 2
        %v1406 = vsel %vm1098, %v1403, %v1405
        %v1407 = vrot.slane %v1351, 2
        %v1408 = vrot.slane %v1352, 2
        %v1409 = vsel %vm1098, %v1407, %v1408
        %v1410 = vrot.slane %v1353, 2
        %v1411 = vsel %vm1098, %v1408, %v1410
        %v1412 = vrot.slane %v1354, 2
        %v1413 = vrot.slane %v1355, 2
        %v1414 = vsel %vm1098, %v1412, %v1413
        %v1415 = vrot.slane %v1356, 2
        %v1416 = vsel %vm1098, %v1413, %v1415
        %v1417 = vrot.slane %v1357, 2
        %v1418 = vrot.slane %v1358, 2
        %v1419 = vsel %vm1098, %v1417, %v1418
        %v1420 = vrot.slane %v1359, 2
        %v1421 = vsel %vm1098, %v1418, %v1420
        %v1422 = vrot.slane %v1360, 2
        %v1423 = vrot.slane %v1361, 2
        %v1424 = vsel %vm1098, %v1422, %v1423
        %v1425 = vrot.slane %v1362, 2
        %v1426 = vsel %vm1098, %v1423, %v1425
        %v1443 = vadd.f32 %v1318, %v1389
        %v1444 = vadd.f32 %v1319, %v1391
        %v1445 = vadd.f32 %v1320, %v1394
        %v1446 = vadd.f32 %v1321, %v1396
        %v1447 = vadd.f32 %v1322, %v1399
        %v1448 = vadd.f32 %v1323, %v1401
        %v1449 = vadd.f32 %v1324, %v1404
        %v1450 = vadd.f32 %v1325, %v1406
        %v1451 = vadd.f32 %v1326, %v1409
        %v1452 = vadd.f32 %v1327, %v1411
        %v1453 = vadd.f32 %v1328, %v1414
        %v1454 = vadd.f32 %v1329, %v1416
        %v1455 = vadd.f32 %v1330, %v1419
        %v1456 = vadd.f32 %v1331, %v1421
        %v1457 = vadd.f32 %v1332, %v1424
        %v1458 = vadd.f32 %v1333, %v1426
        %s1459 = scalar_lea.vmem [#allocation7], 8
        %v1460 = vld [vmem:[%s1459] sm:$0x1]
        %v1461 = vlaneseq
        %v1462 = vshrl.u32 %v1461, 7
        %v1463 = vsub.s32 0, %v1462
        %v1464 = vrot.slane %v1460, %v1463
        %v1465 = vmul.f32 %v858, %v1464
        %v1466 = vmul.f32 %v859, %v1464
        %v1467 = vmul.f32 %v861, %v1464
        %v1468 = vmul.f32 %v862, %v1464
        %v1469 = vmul.f32 %v864, %v1464
        %v1470 = vmul.f32 %v865, %v1464
        %v1471 = vmul.f32 %v867, %v1464
        %v1472 = vmul.f32 %v868, %v1464
        %v1473 = vmul.f32 %v870, %v1464
        %v1474 = vmul.f32 %v871, %v1464
        %v1475 = vmul.f32 %v873, %v1464
        %v1476 = vmul.f32 %v874, %v1464
        %v1477 = vmul.f32 %v876, %v1464
        %v1478 = vmul.f32 %v877, %v1464
        %v1479 = vmul.f32 %v879, %v1464
        %v1480 = vmul.f32 %v880, %v1464
        %v1481 = vadd.f32 %v1443, %v1465
        %v1482 = vadd.f32 %v1444, %v1466
        %v1483 = vadd.f32 %v1445, %v1467
        %v1484 = vadd.f32 %v1446, %v1468
        %v1485 = vadd.f32 %v1447, %v1469
        %v1486 = vadd.f32 %v1448, %v1470
        %v1487 = vadd.f32 %v1449, %v1471
        %v1488 = vadd.f32 %v1450, %v1472
        %v1489 = vadd.f32 %v1451, %v1473
        %v1490 = vadd.f32 %v1452, %v1474
        %v1491 = vadd.f32 %v1453, %v1475
        %v1492 = vadd.f32 %v1454, %v1476
        %v1493 = vadd.f32 %v1455, %v1477
        %v1494 = vadd.f32 %v1456, %v1478
        %v1495 = vadd.f32 %v1457, %v1479
        %v1496 = vadd.f32 %v1458, %v1480
        %v1497 = vld [vmem:[%s1459 + $0x1] sm:$0x1]
        %v1498 = vlaneseq
        %v1499 = vshrl.u32 %v1498, 7
        %v1500 = vsub.s32 0, %v1499
        %v1501 = vrot.slane %v1497, %v1500
        %v1502 = vmul.f32 %v858, %v1501
        %v1503 = vmul.f32 %v859, %v1501
        %v1504 = vmul.f32 %v860, %v1501
        %v1505 = vmul.f32 %v861, %v1501
        %v1506 = vmul.f32 %v862, %v1501
        %v1507 = vmul.f32 %v863, %v1501
        %v1508 = vmul.f32 %v864, %v1501
        %v1509 = vmul.f32 %v865, %v1501
        %v1510 = vmul.f32 %v866, %v1501
        %v1511 = vmul.f32 %v867, %v1501
        %v1512 = vmul.f32 %v868, %v1501
        %v1513 = vmul.f32 %v869, %v1501
        %v1514 = vmul.f32 %v870, %v1501
        %v1515 = vmul.f32 %v871, %v1501
        %v1516 = vmul.f32 %v872, %v1501
        %v1517 = vmul.f32 %v873, %v1501
        %v1518 = vmul.f32 %v874, %v1501
        %v1519 = vmul.f32 %v875, %v1501
        %v1520 = vmul.f32 %v876, %v1501
        %v1521 = vmul.f32 %v877, %v1501
        %v1522 = vmul.f32 %v878, %v1501
        %v1523 = vmul.f32 %v879, %v1501
        %v1524 = vmul.f32 %v880, %v1501
        %v1525 = vmul.f32 %v881, %v1501
        %v1550 = vrot.slane %v1502, 1
        %v1551 = vrot.slane %v1503, 1
        %v1552 = vsel %vm972, %v1550, %v1551
        %v1553 = vrot.slane %v1504, 1
        %v1554 = vsel %vm972, %v1551, %v1553
        %v1555 = vrot.slane %v1505, 1
        %v1556 = vrot.slane %v1506, 1
        %v1557 = vsel %vm972, %v1555, %v1556
        %v1558 = vrot.slane %v1507, 1
        %v1559 = vsel %vm972, %v1556, %v1558
        %v1560 = vrot.slane %v1508, 1
        %v1561 = vrot.slane %v1509, 1
        %v1562 = vsel %vm972, %v1560, %v1561
        %v1563 = vrot.slane %v1510, 1
        %v1564 = vsel %vm972, %v1561, %v1563
        %v1565 = vrot.slane %v1511, 1
        %v1566 = vrot.slane %v1512, 1
        %v1567 = vsel %vm972, %v1565, %v1566
        %v1568 = vrot.slane %v1513, 1
        %v1569 = vsel %vm972, %v1566, %v1568
        %v1570 = vrot.slane %v1514, 1
        %v1571 = vrot.slane %v1515, 1
        %v1572 = vsel %vm972, %v1570, %v1571
        %v1573 = vrot.slane %v1516, 1
        %v1574 = vsel %vm972, %v1571, %v1573
        %v1575 = vrot.slane %v1517, 1
        %v1576 = vrot.slane %v1518, 1
        %v1577 = vsel %vm972, %v1575, %v1576
        %v1578 = vrot.slane %v1519, 1
        %v1579 = vsel %vm972, %v1576, %v1578
        %v1580 = vrot.slane %v1520, 1
        %v1581 = vrot.slane %v1521, 1
        %v1582 = vsel %vm972, %v1580, %v1581
        %v1583 = vrot.slane %v1522, 1
        %v1584 = vsel %vm972, %v1581, %v1583
        %v1585 = vrot.slane %v1523, 1
        %v1586 = vrot.slane %v1524, 1
        %v1587 = vsel %vm972, %v1585, %v1586
        %v1588 = vrot.slane %v1525, 1
        %v1589 = vsel %vm972, %v1586, %v1588
        %v1606 = vadd.f32 %v1481, %v1552
        %v1607 = vadd.f32 %v1482, %v1554
        %v1608 = vadd.f32 %v1483, %v1557
        %v1609 = vadd.f32 %v1484, %v1559
        %v1610 = vadd.f32 %v1485, %v1562
        %v1611 = vadd.f32 %v1486, %v1564
        %v1612 = vadd.f32 %v1487, %v1567
        %v1613 = vadd.f32 %v1488, %v1569
        %v1614 = vadd.f32 %v1489, %v1572
        %v1615 = vadd.f32 %v1490, %v1574
        %v1616 = vadd.f32 %v1491, %v1577
        %v1617 = vadd.f32 %v1492, %v1579
        %v1618 = vadd.f32 %v1493, %v1582
        %v1619 = vadd.f32 %v1494, %v1584
        %v1620 = vadd.f32 %v1495, %v1587
        %v1621 = vadd.f32 %v1496, %v1589
        %v1622 = vld [vmem:[%s1459 + $0x2] sm:$0x1]
        %v1623 = vlaneseq
        %v1624 = vshrl.u32 %v1623, 7
        %v1625 = vsub.s32 0, %v1624
        %v1626 = vrot.slane %v1622, %v1625
        %v1627 = vmul.f32 %v858, %v1626
        %v1628 = vmul.f32 %v859, %v1626
        %v1629 = vmul.f32 %v860, %v1626
        %v1630 = vmul.f32 %v861, %v1626
        %v1631 = vmul.f32 %v862, %v1626
        %v1632 = vmul.f32 %v863, %v1626
        %v1633 = vmul.f32 %v864, %v1626
        %v1634 = vmul.f32 %v865, %v1626
        %v1635 = vmul.f32 %v866, %v1626
        %v1636 = vmul.f32 %v867, %v1626
        %v1637 = vmul.f32 %v868, %v1626
        %v1638 = vmul.f32 %v869, %v1626
        %v1639 = vmul.f32 %v870, %v1626
        %v1640 = vmul.f32 %v871, %v1626
        %v1641 = vmul.f32 %v872, %v1626
        %v1642 = vmul.f32 %v873, %v1626
        %v1643 = vmul.f32 %v874, %v1626
        %v1644 = vmul.f32 %v875, %v1626
        %v1645 = vmul.f32 %v876, %v1626
        %v1646 = vmul.f32 %v877, %v1626
        %v1647 = vmul.f32 %v878, %v1626
        %v1648 = vmul.f32 %v879, %v1626
        %v1649 = vmul.f32 %v880, %v1626
        %v1650 = vmul.f32 %v881, %v1626
        %v1675 = vrot.slane %v1627, 2
        %v1676 = vrot.slane %v1628, 2
        %v1677 = vsel %vm1098, %v1675, %v1676
        %v1678 = vrot.slane %v1629, 2
        %v1679 = vsel %vm1098, %v1676, %v1678
        %v1680 = vrot.slane %v1630, 2
        %v1681 = vrot.slane %v1631, 2
        %v1682 = vsel %vm1098, %v1680, %v1681
        %v1683 = vrot.slane %v1632, 2
        %v1684 = vsel %vm1098, %v1681, %v1683
        %v1685 = vrot.slane %v1633, 2
        %v1686 = vrot.slane %v1634, 2
        %v1687 = vsel %vm1098, %v1685, %v1686
        %v1688 = vrot.slane %v1635, 2
        %v1689 = vsel %vm1098, %v1686, %v1688
        %v1690 = vrot.slane %v1636, 2
        %v1691 = vrot.slane %v1637, 2
        %v1692 = vsel %vm1098, %v1690, %v1691
        %v1693 = vrot.slane %v1638, 2
        %v1694 = vsel %vm1098, %v1691, %v1693
        %v1695 = vrot.slane %v1639, 2
        %v1696 = vrot.slane %v1640, 2
        %v1697 = vsel %vm1098, %v1695, %v1696
        %v1698 = vrot.slane %v1641, 2
        %v1699 = vsel %vm1098, %v1696, %v1698
        %v1700 = vrot.slane %v1642, 2
        %v1701 = vrot.slane %v1643, 2
        %v1702 = vsel %vm1098, %v1700, %v1701
        %v1703 = vrot.slane %v1644, 2
        %v1704 = vsel %vm1098, %v1701, %v1703
        %v1705 = vrot.slane %v1645, 2
        %v1706 = vrot.slane %v1646, 2
        %v1707 = vsel %vm1098, %v1705, %v1706
        %v1708 = vrot.slane %v1647, 2
        %v1709 = vsel %vm1098, %v1706, %v1708
        %v1710 = vrot.slane %v1648, 2
        %v1711 = vrot.slane %v1649, 2
        %v1712 = vsel %vm1098, %v1710, %v1711
        %v1713 = vrot.slane %v1650, 2
        %v1714 = vsel %vm1098, %v1711, %v1713
        %v1731 = vadd.f32 %v1606, %v1677
        %v1732 = vadd.f32 %v1607, %v1679
        %v1733 = vadd.f32 %v1608, %v1682
        %v1734 = vadd.f32 %v1609, %v1684
        %v1735 = vadd.f32 %v1610, %v1687
        %v1736 = vadd.f32 %v1611, %v1689
        %v1737 = vadd.f32 %v1612, %v1692
        %v1738 = vadd.f32 %v1613, %v1694
        %v1739 = vadd.f32 %v1614, %v1697
        %v1740 = vadd.f32 %v1615, %v1699
        %v1741 = vadd.f32 %v1616, %v1702
        %v1742 = vadd.f32 %v1617, %v1704
        %v1743 = vadd.f32 %v1618, %v1707
        %v1744 = vadd.f32 %v1619, %v1709
        %v1745 = vadd.f32 %v1620, %v1712
        %v1746 = vadd.f32 %v1621, %v1714
        %v1747 = vld [vmem:[%s4] sm:$0x1]
        %v1749 = vlaneseq
        %v1750 = vshrl.u32 %v1749, 7
        %v1751 = vsub.s32 0, %v1750
        %v1752 = vrot.slane %v1747, %v1751
        %v1754 = vadd.f32 %v1731, %v1752
        %v1755 = vadd.f32 %v1732, %v1752
        %v1756 = vadd.f32 %v1733, %v1752
        %v1757 = vadd.f32 %v1734, %v1752
        %v1758 = vadd.f32 %v1735, %v1752
        %v1759 = vadd.f32 %v1736, %v1752
        %v1760 = vadd.f32 %v1737, %v1752
        %v1761 = vadd.f32 %v1738, %v1752
        %v1762 = vadd.f32 %v1739, %v1752
        %v1763 = vadd.f32 %v1740, %v1752
        %v1764 = vadd.f32 %v1741, %v1752
        %v1765 = vadd.f32 %v1742, %v1752
        %v1766 = vadd.f32 %v1743, %v1752
        %v1767 = vadd.f32 %v1744, %v1752
        %v1768 = vadd.f32 %v1745, %v1752
        %v1769 = vadd.f32 %v1746, %v1752
        %v1770 = vmax.f32 %v1754, 0.0
        %v1771 = vmax.f32 %v1755, 0.0
        %v1772 = vmax.f32 %v1756, 0.0
        %v1773 = vmax.f32 %v1757, 0.0
        %v1774 = vmax.f32 %v1758, 0.0
        %v1775 = vmax.f32 %v1759, 0.0
        %v1776 = vmax.f32 %v1760, 0.0
        %v1777 = vmax.f32 %v1761, 0.0
        %v1778 = vmax.f32 %v1762, 0.0
        %v1779 = vmax.f32 %v1763, 0.0
        %v1780 = vmax.f32 %v1764, 0.0
        %v1781 = vmax.f32 %v1765, 0.0
        %v1782 = vmax.f32 %v1766, 0.0
        %v1783 = vmax.f32 %v1767, 0.0
        %v1784 = vmax.f32 %v1768, 0.0
        %v1785 = vmax.f32 %v1769, 0.0
        %v1786 = vmin.f32 %v1770, 6.0
        %v1787 = vmin.f32 %v1771, 6.0
        %v1788 = vmin.f32 %v1772, 6.0
        %v1789 = vmin.f32 %v1773, 6.0
        %v1790 = vmin.f32 %v1774, 6.0
        %v1791 = vmin.f32 %v1775, 6.0
        %v1792 = vmin.f32 %v1776, 6.0
        %v1793 = vmin.f32 %v1777, 6.0
        %v1794 = vmin.f32 %v1778, 6.0
        %v1795 = vmin.f32 %v1779, 6.0
        %v1796 = vmin.f32 %v1780, 6.0
        %v1797 = vmin.f32 %v1781, 6.0
        %v1798 = vmin.f32 %v1782, 6.0
        %v1799 = vmin.f32 %v1783, 6.0
        %v1800 = vmin.f32 %v1784, 6.0
        %v1801 = vmin.f32 %v1785, 6.0
        %v1802 = vld [vmem:[#allocation8] sm:$0xff]
        %v1803 = vld [vmem:[#allocation8 + $0x8] sm:$0xff]
        %v1804 = vld [vmem:[#allocation8 + $0x10] sm:$0xff]
        %v1805 = vld [vmem:[#allocation8 + $0x18] sm:$0xff]
        %v1806 = vld [vmem:[#allocation8 + $0x20] sm:$0xff]
        %v1807 = vld [vmem:[#allocation8 + $0x28] sm:$0xff]
        %v1808 = vld [vmem:[#allocation8 + $0x30] sm:$0xff]
        %v1809 = vld [vmem:[#allocation8 + $0x38] sm:$0xff]
        %v1810 = vld [vmem:[#allocation8 + $0x40] sm:$0xff]
        %v1811 = vld [vmem:[#allocation8 + $0x48] sm:$0xff]
        %v1812 = vld [vmem:[#allocation8 + $0x50] sm:$0xff]
        %v1813 = vld [vmem:[#allocation8 + $0x58] sm:$0xff]
        %v1814 = vld [vmem:[#allocation8 + $0x60] sm:$0xff]
        %v1815 = vld [vmem:[#allocation8 + $0x68] sm:$0xff]
        %v1816 = vld [vmem:[#allocation8 + $0x70] sm:$0xff]
        %v1817 = vld [vmem:[#allocation8 + $0x78] sm:$0xff]
        %v1818 = vld [vmem:[%s6] sm:$0x1]
        %v1820 = vlaneseq
        %v1821 = vshrl.u32 %v1820, 7
        %v1822 = vsub.s32 0, %v1821
        %v1823 = vrot.slane %v1818, %v1822
        %1825 = vmatprep.subr.mxu0 0.0
        %1826 = vmatpush1.msra.mxu0 %v1802
        %1827 = vmatprep.subr.mxu0 0.0
        %1828 = vmatpush1.msra.mxu0 %v1803
        %1829 = vmatprep.subr.mxu0 0.0
        %1830 = vmatpush1.msra.mxu0 %v1804
        %1831 = vmatprep.subr.mxu0 0.0
        %1832 = vmatpush1.msra.mxu0 %v1805
        %1833 = vmatprep.subr.mxu0 0.0
        %1834 = vmatpush1.msra.mxu0 %v1806
        %1835 = vmatprep.subr.mxu0 0.0
        %1836 = vmatpush1.msra.mxu0 %v1807
        %1837 = vmatprep.subr.mxu0 0.0
        %1838 = vmatpush1.msra.mxu0 %v1808
        %1839 = vmatprep.subr.mxu0 0.0
        %1840 = vmatpush1.msra.mxu0 %v1809
        %1841 = vmatprep.subr.mxu0 0.0
        %1842 = vmatpush1.msra.mxu0 %v1810
        %1843 = vmatprep.subr.mxu0 0.0
        %1844 = vmatpush1.msra.mxu0 %v1811
        %1845 = vmatprep.subr.mxu0 0.0
        %1846 = vmatpush1.msra.mxu0 %v1812
        %1847 = vmatprep.subr.mxu0 0.0
        %1848 = vmatpush1.msra.mxu0 %v1813
        %1849 = vmatprep.subr.mxu0 0.0
        %1850 = vmatpush1.msra.mxu0 %v1814
        %1851 = vmatprep.subr.mxu0 0.0
        %1852 = vmatpush1.msra.mxu0 %v1815
        %1853 = vmatprep.subr.mxu0 0.0
        %1854 = vmatpush1.msra.mxu0 %v1816
        %1855 = vmatprep.subr.mxu0 0.0
        %1856 = vmatpush1.msra.mxu0 %v1817
        %1857 = vmatprep.subr.mxu0 0.0
        %1858 = vmatpush1.msra.mxu0 0.0
        %1859 = vmatprep.subr.mxu0 0.0
        %1860 = vmatpush1.msra.mxu0 0.0
        %1861 = vmatprep.subr.mxu0 0.0
        %1862 = vmatpush1.msra.mxu0 0.0
        %1863 = vmatprep.subr.mxu0 0.0
        %1864 = vmatpush1.msra.mxu0 0.0
        %1865 = vmatprep.subr.mxu0 0.0
        %1866 = vmatpush1.msra.mxu0 0.0
        %1867 = vmatprep.subr.mxu0 0.0
        %1868 = vmatpush1.msra.mxu0 0.0
        %1869 = vmatprep.subr.mxu0 0.0
        %1870 = vmatpush1.msra.mxu0 0.0
        %1871 = vmatprep.subr.mxu0 0.0
        %1872 = vmatpush1.msra.mxu0 0.0
        %1873 = vmatprep.subr.mxu0 0.0
        %1874 = vmatpush1.msra.mxu0 0.0
        %1875 = vmatprep.subr.mxu0 0.0
        %1876 = vmatpush1.msra.mxu0 0.0
        %1877 = vmatprep.subr.mxu0 0.0
        %1878 = vmatpush1.msra.mxu0 0.0
        %1879 = vmatprep.subr.mxu0 0.0
        %1880 = vmatpush1.msra.mxu0 0.0
        %1881 = vmatprep.subr.mxu0 0.0
        %1882 = vmatpush1.msra.mxu0 0.0
        %1883 = vmatprep.subr.mxu0 0.0
        %1884 = vmatpush1.msra.mxu0 0.0
        %1885 = vmatprep.subr.mxu0 0.0
        %1886 = vmatpush1.msra.mxu0 0.0
        %1887 = vmatprep.subr.mxu0 0.0
        %1888 = vmatpush1.msra.mxu0 0.0
        %1889 = vmatprep.mubr.f32.mxu0 0.0
        %1890 = vmatmul.mubr.f32.gmra.mrb[0].mxu0 %v1786
        %v1891 = vpop.f32.mrb[0].mxu0
        %v1892 = vadd.f32 %v1823, %v1891
        %v1893 = vpop.f32.mrb[0].mxu0
        %1894 = vmatprep.mubr.f32.mxu0 0.0
        %1895 = vmatmul.mubr.f32.gmra.mrb[0].mxu0 %v1787
        %v1896 = vpop.f32.mrb[0].mxu0
        %v1897 = vadd.f32 %v1823, %v1896
        %v1898 = vpop.f32.mrb[0].mxu0
        %1899 = vmatprep.mubr.f32.mxu0 0.0
        %1900 = vmatmul.mubr.f32.gmra.mrb[0].mxu0 %v1788
        %v1901 = vpop.f32.mrb[0].mxu0
        %v1902 = vadd.f32 %v1823, %v1901
        %v1903 = vpop.f32.mrb[0].mxu0
        %1904 = vmatprep.mubr.f32.mxu0 0.0
        %1905 = vmatmul.mubr.f32.gmra.mrb[0].mxu0 %v1789
        %v1906 = vpop.f32.mrb[0].mxu0
        %v1907 = vadd.f32 %v1823, %v1906
        %v1908 = vpop.f32.mrb[0].mxu0
        %1909 = vmatprep.mubr.f32.mxu0 0.0
        %1910 = vmatmul.mubr.f32.gmra.mrb[0].mxu0 %v1790
        %v1911 = vpop.f32.mrb[0].mxu0
        %v1912 = vadd.f32 %v1823, %v1911
        %v1913 = vpop.f32.mrb[0].mxu0
        %1914 = vmatprep.mubr.f32.mxu0 0.0
        %1915 = vmatmul.mubr.f32.gmra.mrb[0].mxu0 %v1791
        %v1916 = vpop.f32.mrb[0].mxu0
        %v1917 = vadd.f32 %v1823, %v1916
        %v1918 = vpop.f32.mrb[0].mxu0
        %1919 = vmatprep.mubr.f32.mxu0 0.0
        %1920 = vmatmul.mubr.f32.gmra.mrb[0].mxu0 %v1792
        %v1921 = vpop.f32.mrb[0].mxu0
        %v1922 = vadd.f32 %v1823, %v1921
        %v1923 = vpop.f32.mrb[0].mxu0
        %1924 = vmatprep.mubr.f32.mxu0 0.0
        %1925 = vmatmul.mubr.f32.gmra.mrb[0].mxu0 %v1793
        %v1926 = vpop.f32.mrb[0].mxu0
        %v1927 = vadd.f32 %v1823, %v1926
        %v1928 = vpop.f32.mrb[0].mxu0
        %1929 = vmatprep.mubr.f32.mxu0 0.0
        %1930 = vmatmul.mubr.f32.gmra.mrb[0].mxu0 %v1794
        %v1931 = vpop.f32.mrb[0].mxu0
        %v1932 = vadd.f32 %v1823, %v1931
        %v1933 = vpop.f32.mrb[0].mxu0
        %1934 = vmatprep.mubr.f32.mxu0 0.0
        %1935 = vmatmul.mubr.f32.gmra.mrb[0].mxu0 %v1795
        %v1936 = vpop.f32.mrb[0].mxu0
        %v1937 = vadd.f32 %v1823, %v1936
        %v1938 = vpop.f32.mrb[0].mxu0
        %1939 = vmatprep.mubr.f32.mxu0 0.0
        %1940 = vmatmul.mubr.f32.gmra.mrb[0].mxu0 %v1796
        %v1941 = vpop.f32.mrb[0].mxu0
        %v1942 = vadd.f32 %v1823, %v1941
        %v1943 = vpop.f32.mrb[0].mxu0
        %1944 = vmatprep.mubr.f32.mxu0 0.0
        %1945 = vmatmul.mubr.f32.gmra.mrb[0].mxu0 %v1797
        %v1946 = vpop.f32.mrb[0].mxu0
        %v1947 = vadd.f32 %v1823, %v1946
        %v1948 = vpop.f32.mrb[0].mxu0
        %1949 = vmatprep.mubr.f32.mxu0 0.0
        %1950 = vmatmul.mubr.f32.gmra.mrb[0].mxu0 %v1798
        %v1951 = vpop.f32.mrb[0].mxu0
        %v1952 = vadd.f32 %v1823, %v1951
        %v1953 = vpop.f32.mrb[0].mxu0
        %1954 = vmatprep.mubr.f32.mxu0 0.0
        %1955 = vmatmul.mubr.f32.gmra.mrb[0].mxu0 %v1799
        %v1956 = vpop.f32.mrb[0].mxu0
        %v1957 = vadd.f32 %v1823, %v1956
        %v1958 = vpop.f32.mrb[0].mxu0
        %1959 = vmatprep.mubr.f32.mxu0 0.0
        %1960 = vmatmul.mubr.f32.gmra.mrb[0].mxu0 %v1800
        %v1961 = vpop.f32.mrb[0].mxu0
        %v1962 = vadd.f32 %v1823, %v1961
        %v1963 = vpop.f32.mrb[0].mxu0
        %1964 = vmatprep.mubr.f32.mxu0 0.0
        %1965 = vmatmul.mubr.f32.gmra.mrb[0].mxu0 %v1801
        %v1966 = vpop.f32.mrb[0].mxu0
        %v1967 = vadd.f32 %v1823, %v1966
        %v1968 = vpop.f32.mrb[0].mxu0
        %1969 = vdwg.mxu0
        %v1994 = vrot.slane %v344, 1
        %v1995 = vrot.slane %v345, 1
        %v1996 = vsel %vm972, %v1994, %v1995
        %v1997 = vrot.slane %v346, 1
        %v1998 = vsel %vm972, %v1995, %v1997
        %v1999 = vrot.slane %v347, 1
        %v2000 = vrot.slane %v348, 1
        %v2001 = vsel %vm972, %v1999, %v2000
        %v2002 = vrot.slane %v349, 1
        %v2003 = vsel %vm972, %v2000, %v2002
        %v2004 = vrot.slane %v350, 1
        %v2005 = vrot.slane %v351, 1
        %v2006 = vsel %vm972, %v2004, %v2005
        %v2007 = vrot.slane %v352, 1
        %v2008 = vsel %vm972, %v2005, %v2007
        %v2009 = vrot.slane %v353, 1
        %v2010 = vrot.slane %v354, 1
        %v2011 = vsel %vm972, %v2009, %v2010
        %v2012 = vrot.slane %v355, 1
        %v2013 = vsel %vm972, %v2010, %v2012
        %v2014 = vrot.slane %v356, 1
        %v2015 = vrot.slane %v357, 1
        %v2016 = vsel %vm972, %v2014, %v2015
        %v2017 = vrot.slane %v358, 1
        %v2018 = vsel %vm972, %v2015, %v2017
        %v2019 = vrot.slane %v359, 1
        %v2020 = vrot.slane %v360, 1
        %v2021 = vsel %vm972, %v2019, %v2020
        %v2022 = vrot.slane %v361, 1
        %v2023 = vsel %vm972, %v2020, %v2022
        %v2024 = vrot.slane %v362, 1
        %v2025 = vrot.slane %v363, 1
        %v2026 = vsel %vm972, %v2024, %v2025
        %v2027 = vrot.slane %v364, 1
        %v2028 = vsel %vm972, %v2025, %v2027
        %v2029 = vrot.slane %v365, 1
        %v2030 = vrot.slane %v366, 1
        %v2031 = vsel %vm972, %v2029, %v2030
        %v2032 = vrot.slane %v367, 1
        %v2033 = vsel %vm972, %v2030, %v2032
        %v2050 = vadd.f32 %v1892, %v1996
        %v2051 = vadd.f32 %v1897, %v1998
        %v2052 = vadd.f32 %v1902, %v2001
        %v2053 = vadd.f32 %v1907, %v2003
        %v2054 = vadd.f32 %v1912, %v2006
        %v2055 = vadd.f32 %v1917, %v2008
        %v2056 = vadd.f32 %v1922, %v2011
        %v2057 = vadd.f32 %v1927, %v2013
        %v2058 = vadd.f32 %v1932, %v2016
        %v2059 = vadd.f32 %v1937, %v2018
        %v2060 = vadd.f32 %v1942, %v2021
        %v2061 = vadd.f32 %v1947, %v2023
        %v2062 = vadd.f32 %v1952, %v2026
        %v2063 = vadd.f32 %v1957, %v2028
        %v2064 = vadd.f32 %v1962, %v2031
        %v2065 = vadd.f32 %v1967, %v2033
        %2066 = vst [vmem:[%s340] sm:$0xff] %v2050
        %2067 = vst [vmem:[%s340 + $0x8] sm:$0xff] %v2051
        %2068 = vst [vmem:[%s340 + $0x10] sm:$0xff] %v2052
        %2069 = vst [vmem:[%s340 + $0x18] sm:$0xff] %v2053
        %2070 = vst [vmem:[%s340 + $0x20] sm:$0xff] %v2054
        %2071 = vst [vmem:[%s340 + $0x28] sm:$0xff] %v2055
        %2072 = vst [vmem:[%s340 + $0x30] sm:$0xff] %v2056
        %2073 = vst [vmem:[%s340 + $0x38] sm:$0xff] %v2057
        %2074 = vst [vmem:[%s340 + $0x40] sm:$0xff] %v2058
        %2075 = vst [vmem:[%s340 + $0x48] sm:$0xff] %v2059
        %2076 = vst [vmem:[%s340 + $0x50] sm:$0xff] %v2060
        %2077 = vst [vmem:[%s340 + $0x58] sm:$0xff] %v2061
        %2078 = vst [vmem:[%s340 + $0x60] sm:$0xff] %v2062
        %2079 = vst [vmem:[%s340 + $0x68] sm:$0xff] %v2063
        %2080 = vst [vmem:[%s340 + $0x70] sm:$0xff] %v2064
        %2081 = vst [vmem:[%s340 + $0x78] sm:$0xff] %v2065
        %s2082 = sand.u32 %s186, 1
        %s2083 = scalar_lea.sflag [#allocation4], %s2082
        %s2084 = sand.u32 %s186, 1
        %s2085 = smul.addr %s2084, 128
        %s2086 = scalar_lea.vmem [#allocation10], %s2085
        // Predicated region
        $region65: #{tpu_custom_call.1} parent=47 // pred_check
          %p2087 = pneg %p196
        $region66: #{tpu_custom_call.1} parent=47 // pred_check_branch
          %2089 = sbr.rel (%p2087) target = $region68
        $region67: #{tpu_custom_call.1} parent=47 // pred_region
          %s2091 = ssub.s32 2048, 2048
          %2092 = vsyncadd %s2083, %s2091
          %s2093 = smul.addr %s26, 16
          %s2094 = smul.addr %s2093, 128
          %s2095 = scalar_lea.hbm %s7, %s2094
          %s2096 = sshll.u32 %s2086, 4
          %s2097 = int_to_ptr.vmem [resolvable:$true] %s2096
          %2102 = dma.vmem_to_hbm [thread:$0]  %s2097, 2048, %s2095, %s2083, 128, 128, 8
        $region68: #{tpu_custom_call.1} parent=47 // pred_fallthru
          _
      $region48: #{tpu_custom_call.1} parent=5 // pred_fallthru
        _
      %p2103 = scmp.le.s32.totalorder 2, %s21
      // Predicated region
      $region69: #{tpu_custom_call.1} parent=5 // pred_check
        %p2104 = pneg %p2103
      $region70: #{tpu_custom_call.1} parent=5 // pred_check_branch
        %2106 = sbr.rel (%p2104) target = $region72
      $region71: #{tpu_custom_call.1} parent=5 // pred_region
        %s2107 = ssub.s32 %s21, 2
        // Predicated region
        $region73: #{tpu_custom_call.1} parent=71 // pred_check
          %p2108 = pneg %p202
        $region74: #{tpu_custom_call.1} parent=71 // pred_check_branch
          %2110 = sbr.rel (%p2108) target = $region76
        $region75: #{tpu_custom_call.1} parent=71 // pred_region
          %s2111 = sand.u32 %s187, 1
          %s2112 = scalar_lea.sflag [#allocation4], %s2111
          %s2113 = sand.u32 %s187, 1
          %s2114 = smul.addr %s2113, 128
          %s2115 = scalar_lea.vmem [#allocation10], %s2114
          %2116 = dma.done %s2112, 2048
        $region76: #{tpu_custom_call.1} parent=71 // pred_fallthru
          _
      $region72: #{tpu_custom_call.1} parent=5 // pred_fallthru
        _
    $region6: #{tpu_custom_call.1} parent=1 // loop_footer
      %s25 = sadd.s32 1, %s21
    $region7: #{tpu_custom_call.1} parent=1 // loop_footer_branch
      %20 = sbr.rel target = $region3
    $region8: #{tpu_custom_call.1} parent=1 // loop_exit
      _
    %2117 = vsyncpa [#allocation3], 1
    %s2118 = scalar_lea.sflag [#allocation3], 1
    %2119 = vsyncpa %s2118, 1
    %2120 = vsyncpa [#allocation6], 1
    %2121 = vsyncpa [#allocation9], 1
    %2122 = vsyncpa [#allocation4], 1
    %s2123 = scalar_lea.sflag [#allocation4], 1
    %2124 = vsyncpa %s2123, 1

</llo_original>
